<compile_context>
chip_gen: v5e
topology: v5e:2x2
jax: 0.10.0
libtpu: 0.0.40
codegen_flags: <defaults>
</compile_context>

<pallas_src>
import functools

import jax
import jax.numpy as jnp
from jax.experimental import pallas as pl
from jax.experimental.pallas import tpu as pltpu


def _round_up(x, m):
    return (x + m - 1) // m * m


def _pad_to(x, shape):
    pads = [(0, t - s) for s, t in zip(x.shape, shape)]
    return jnp.pad(x, pads)


# ----------------------------------------------------------------------------
# Kernel 1: LSTM step + dot attention + concat Linear + tanh
# ----------------------------------------------------------------------------
def _lstm_attn_kernel(s_actual,
                      x_ref, h0_ref, c0_ref, enc_ref,
                      wih_ref, whh_ref, bl_ref,
                      wc_rnn_ref, wc_ctx_ref, bc_ref,
                      h_ref, c_ref, attn_ref, concat_ref):
    Hp = h_ref.shape[1]

    # ---- single-step LSTM (PyTorch gate order i, f, g, o), bf16 matmul / f32 accumulate ----
    gates = (jnp.dot(x_ref[...], wih_ref[...], preferred_element_type=jnp.float32)
             + jnp.dot(h0_ref[...], whh_ref[...], preferred_element_type=jnp.float32)
             + bl_ref[...])                                       # (Bp, 4*Hp) f32
    i_g = jax.nn.sigmoid(gates[:, 0 * Hp:1 * Hp])
    f_g = jax.nn.sigmoid(gates[:, 1 * Hp:2 * Hp])
    g_g = jnp.tanh(gates[:, 2 * Hp:3 * Hp])
    o_g = jax.nn.sigmoid(gates[:, 3 * Hp:4 * Hp])
    c_new = f_g * c0_ref[...] + i_g * g_g                         # (Bp, Hp) f32
    h_new = o_g * jnp.tanh(c_new)                                 # (Bp, Hp) f32 == rnn_output

    # ---- Luong 'dot' attention on the MXU ----
    enc = enc_ref[...]                                            # (Bp, Sp, Hp) bf16
    h3 = h_new.astype(jnp.bfloat16)[:, None, :]                   # (Bp, 1, Hp)
    scores = jnp.einsum('bqh,bsh->bqs', h3, enc,
                        preferred_element_type=jnp.float32)       # (Bp, 1, Sp)

    sp = scores.shape[2]
    if s_actual < sp:                                             # mask encoder padding
        col = jax.lax.broadcasted_iota(jnp.int32, scores.shape, 2)
        scores = jnp.where(col < s_actual, scores, -1e30)

    scores = scores - jnp.max(scores, axis=-1, keepdims=True)
    e = jnp.exp(scores)
    attn3 = e * pl.reciprocal(jnp.sum(e, axis=-1, keepdims=True), approx=True)  # (Bp,1,Sp) f32

    # ---- context = attn bmm encoder_outputs (MXU) ----
    context = jnp.einsum('bqs,bsh->bqh', attn3.astype(jnp.bfloat16), enc,
                         preferred_element_type=jnp.float32)      # (Bp, 1, Hp) f32
    context2 = context.reshape(context.shape[0], context.shape[2])  # (Bp, Hp)

    # ---- concat Linear(2H -> H) + tanh as split matmul (cat(rnn_output, context)) ----
    concat_out = jnp.tanh(
        jnp.dot(h_new.astype(jnp.bfloat16), wc_rnn_ref[...],
                preferred_element_type=jnp.float32)
        + jnp.dot(context2.astype(jnp.bfloat16), wc_ctx_ref[...],
                  preferred_element_type=jnp.float32)
        + bc_ref[...])                                            # (Bp, Hp) f32

    h_ref[...] = h_new
    c_ref[...] = c_new
    attn_ref[...] = attn3.reshape(attn3.shape[0], attn3.shape[2])
    concat_ref[...] = concat_out.astype(jnp.bfloat16)


# ----------------------------------------------------------------------------
# Kernel 2: output projection, V-tiled grid (weight streaming, parallel axis)
# ----------------------------------------------------------------------------
def _out_proj_kernel(x_ref, w_ref, b_ref, o_ref):
    o_ref[...] = (jnp.dot(x_ref[...], w_ref[...],
                          preferred_element_type=jnp.float32)
                  + b_ref[...])


# ----------------------------------------------------------------------------
# Wrapper: mirrors LuongAttnDecoderRNN.forward
# ----------------------------------------------------------------------------
def luong_decoder_forward(input_seq, last_hidden, encoder_outputs, params, *, tile_v=512):
    h0, c0 = last_hidden                           # each (1, B, H)
    B = input_seq.shape[0]
    H = params["w_hh"].shape[1]
    V = params["w_out"].shape[0]
    S = encoder_outputs.shape[0]

    Bp = _round_up(B, 8)
    Hp = _round_up(H, 128)
    Sp = _round_up(S, 128)
    Vp = _round_up(V, 128)
    TILE_V = min(tile_v, Vp)
    Vp = _round_up(Vp, TILE_V)
    n_tiles = Vp // TILE_V

    # --- glue: embedding gather + dropout(identity, eval) + layout/padding prep ---
    embedded = params["embedding"][input_seq]                        # (B, H)
    x_p = _pad_to(embedded, (Bp, Hp)).astype(jnp.bfloat16)
    h0_p = _pad_to(h0[0], (Bp, Hp)).astype(jnp.bfloat16)             # matmul operand only
    c0_p = _pad_to(c0[0], (Bp, Hp)).astype(jnp.float32)              # elementwise -> f32
    enc_p = _pad_to(jnp.transpose(encoder_outputs, (1, 0, 2)),
                    (Bp, Sp, Hp)).astype(jnp.bfloat16)               # (Bp, Sp, Hp)

    # LSTM weights: per-gate pad so each gate slice starts at a 128-lane boundary.
    def prep_lstm_w(w):                                              # (4H, H) -> (Hp, 4*Hp)
        w4 = w.reshape(4, H, H)                                      # (4, H_out, H_in)
        w4t = jnp.transpose(w4, (2, 0, 1))                           # (H_in, 4, H_out)
        w4t = jnp.pad(w4t, ((0, Hp - H), (0, 0), (0, Hp - H)))
        return w4t.reshape(Hp, 4 * Hp).astype(jnp.bfloat16)

    def prep_lstm_b(b):                                              # (4H,) -> (1, 4*Hp)
        b4 = jnp.pad(b.reshape(4, H), ((0, 0), (0, Hp - H)))
        return b4.reshape(1, 4 * Hp).astype(jnp.float32)

    wih_p = prep_lstm_w(params["w_ih"])
    whh_p = prep_lstm_w(params["w_hh"])
    bl_p = prep_lstm_b(params["b_ih"] + params["b_hh"])

    # concat Linear split into rnn / context halves (cat(rnn_output, context) ordering).
    wc_rnn_p = _pad_to(params["w_concat"][:, :H].T, (Hp, Hp)).astype(jnp.bfloat16)
    wc_ctx_p = _pad_to(params["w_concat"][:, H:].T, (Hp, Hp)).astype(jnp.bfloat16)
    bc_p = _pad_to(params["b_concat"].reshape(1, H), (1, Hp)).astype(jnp.float32)

    # output projection weights (streamed per V-tile).
    w_out_p = _pad_to(params["w_out"].T, (Hp, Vp)).astype(jnp.bfloat16)
    b_out_p = _pad_to(params["b_out"].reshape(1, V), (1, Vp)).astype(jnp.float32)

    vmem = pl.BlockSpec(memory_space=pltpu.MemorySpace.VMEM)

    # --- kernel 1: LSTM + attention + concat ---
    h_new_p, c_new_p, attn_p, concat_p = pl.pallas_call(
        functools.partial(_lstm_attn_kernel, S),
        out_shape=(
            jax.ShapeDtypeStruct((Bp, Hp), jnp.float32),    # h_new
            jax.ShapeDtypeStruct((Bp, Hp), jnp.float32),    # c_new
            jax.ShapeDtypeStruct((Bp, Sp), jnp.float32),    # attn weights
            jax.ShapeDtypeStruct((Bp, Hp), jnp.bfloat16),   # concat_output (feeds kernel 2)
        ),
        in_specs=[vmem] * 10,
        out_specs=(vmem, vmem, vmem, vmem),
    )(x_p, h0_p, c0_p, enc_p, wih_p, whh_p, bl_p, wc_rnn_p, wc_ctx_p, bc_p)

    # --- kernel 2: V-tiled output projection (parallel grid axis) ---
    logits_p = pl.pallas_call(
        _out_proj_kernel,
        out_shape=jax.ShapeDtypeStruct((Bp, Vp), jnp.float32),
        grid=(n_tiles,),
        in_specs=[
            pl.BlockSpec((Bp, Hp), lambda j: (0, 0)),
            pl.BlockSpec((Hp, TILE_V), lambda j: (0, j)),
            pl.BlockSpec((1, TILE_V), lambda j: (0, j)),
        ],
        out_specs=pl.BlockSpec((Bp, TILE_V), lambda j: (0, j)),
        compiler_params=pltpu.CompilerParams(
            dimension_semantics=("parallel",)),
    )(concat_p, w_out_p, b_out_p)

    # --- strip padding, restore PyTorch shapes ---
    output = logits_p[:B, :V]                                        # (B, V) raw logits (spec: self.out(...))
    hidden = (h_new_p[:B, :H][None, :, :], c_new_p[:B, :H][None, :, :])  # each (1, B, H)
    attn_weights = attn_p[:B, :S][:, None, :]                        # (B, 1, S)
    return output, hidden, attn_weights


def init_params(key, hidden_size, output_size):
    H, V = hidden_size, output_size
    ks = jax.random.split(key, 9)
    scale = 0.1
    return {
        "embedding": scale * jax.random.normal(ks[0], (V, H), jnp.float32),
        "w_ih": scale * jax.random.normal(ks[1], (4 * H, H), jnp.float32),
        "w_hh": scale * jax.random.normal(ks[2], (4 * H, H), jnp.float32),
        "b_ih": scale * jax.random.normal(ks[3], (4 * H,), jnp.float32),
        "b_hh": scale * jax.random.normal(ks[4], (4 * H,), jnp.float32),
        "w_concat": scale * jax.random.normal(ks[5], (H, 2 * H), jnp.float32),
        "b_concat": scale * jax.random.normal(ks[6], (H,), jnp.float32),
        "w_out": scale * jax.random.normal(ks[7], (V, H), jnp.float32),
        "b_out": scale * jax.random.normal(ks[8], (V,), jnp.float32),
    }


if __name__ == "__main__":
    B, H, S, V = 2, 32, 8, 64   # batch, hidden_size, encoder seq len, output_size

    key = jax.random.PRNGKey(0)
    k_par, k_in, k_h, k_c, k_enc = jax.random.split(key, 5)

    params = init_params(k_par, H, V)
    input_seq = jax.random.randint(k_in, (B,), 0, V, dtype=jnp.int32)          # (B,)
    h0 = 0.1 * jax.random.normal(k_h, (1, B, H), jnp.float32)                  # (1, B, H)
    c0 = 0.1 * jax.random.normal(k_c, (1, B, H), jnp.float32)                  # (1, B, H)
    encoder_outputs = 0.1 * jax.random.normal(k_enc, (S, B, H), jnp.float32)   # (S, B, H)

    output, hidden, attn_weights = luong_decoder_forward(
        input_seq, (h0, c0), encoder_outputs, params)

    jax.block_until_ready((output, hidden, attn_weights))
    assert output.shape == (B, V)
    assert hidden[0].shape == (1, B, H) and hidden[1].shape == (1, B, H)
    assert attn_weights.shape == (B, 1, S)
    assert bool(jnp.all(jnp.isfinite(output)))
    # attention rows must sum to 1 over the real (unpadded) sequence positions
    assert bool(jnp.allclose(attn_weights.sum(-1), 1.0, atol=1e-2))
    print("KERNEL_OK")
</pallas_src>

<mosaic_0001>
module attributes {stable_mosaic.version = 11 : i64} {
  func.func @_lstm_attn_kernel(%arg0: memref<8x128xbf16, #tpu.memory_space<vmem>>, %arg1: memref<8x128xbf16, #tpu.memory_space<vmem>>, %arg2: memref<8x128xf32, #tpu.memory_space<vmem>>, %arg3: memref<8x128x128xbf16, #tpu.memory_space<vmem>>, %arg4: memref<128x512xbf16, #tpu.memory_space<vmem>>, %arg5: memref<128x512xbf16, #tpu.memory_space<vmem>>, %arg6: memref<1x512xf32, #tpu.memory_space<vmem>>, %arg7: memref<128x128xbf16, #tpu.memory_space<vmem>>, %arg8: memref<128x128xbf16, #tpu.memory_space<vmem>>, %arg9: memref<1x128xf32, #tpu.memory_space<vmem>>, %arg10: memref<8x128xf32, #tpu.memory_space<vmem>>, %arg11: memref<8x128xf32, #tpu.memory_space<vmem>>, %arg12: memref<8x128xf32, #tpu.memory_space<vmem>>, %arg13: memref<8x128xbf16, #tpu.memory_space<vmem>>) attributes {dimension_semantics = [], scalar_prefetch = 0 : i64, scratch_operands = 0 : i64, tpu.core_type = #tpu.core_type<tc>} {
    %c0 = arith.constant 0 : index
    %c0_0 = arith.constant 0 : index
    %0 = vector.load %arg0[%c0, %c0_0] : memref<8x128xbf16, #tpu.memory_space<vmem>>, vector<8x128xbf16>
    %c0_1 = arith.constant 0 : index
    %c0_2 = arith.constant 0 : index
    %1 = vector.load %arg4[%c0_1, %c0_2] : memref<128x512xbf16, #tpu.memory_space<vmem>>, vector<128x512xbf16>
    %cst = arith.constant dense<0.000000e+00> : vector<8x512xf32>
    %2 = tpu.matmul %0, %1, %cst {dimension_numbers = #tpu.dot_dimension_numbers<[1], [0], [0], [1], [0, 0, 1, 1], [], []>} : vector<8x128xbf16>, vector<128x512xbf16>, vector<8x512xf32> -> vector<8x512xf32>
    %c0_3 = arith.constant 0 : index
    %c0_4 = arith.constant 0 : index
    %3 = vector.load %arg1[%c0_3, %c0_4] : memref<8x128xbf16, #tpu.memory_space<vmem>>, vector<8x128xbf16>
    %c0_5 = arith.constant 0 : index
    %c0_6 = arith.constant 0 : index
    %4 = vector.load %arg5[%c0_5, %c0_6] : memref<128x512xbf16, #tpu.memory_space<vmem>>, vector<128x512xbf16>
    %cst_7 = arith.constant dense<0.000000e+00> : vector<8x512xf32>
    %5 = tpu.matmul %3, %4, %cst_7 {dimension_numbers = #tpu.dot_dimension_numbers<[1], [0], [0], [1], [0, 0, 1, 1], [], []>} : vector<8x128xbf16>, vector<128x512xbf16>, vector<8x512xf32> -> vector<8x512xf32>
    %6 = arith.addf %2, %5 : vector<8x512xf32>
    %c0_8 = arith.constant 0 : index
    %c0_9 = arith.constant 0 : index
    %7 = vector.load %arg6[%c0_8, %c0_9] : memref<1x512xf32, #tpu.memory_space<vmem>>, vector<1x512xf32>
    %8 = vector.broadcast %7 : vector<1x512xf32> to vector<8x512xf32>
    %9 = arith.addf %6, %8 : vector<8x512xf32>
    %10 = vector.extract_strided_slice %9 {offsets = [0, 0], sizes = [8, 128], strides = [1, 1]} : vector<8x512xf32> to vector<8x128xf32>
    %11 = arith.negf %10 : vector<8x128xf32>
    %12 = math.exp %11 : vector<8x128xf32>
    %cst_10 = arith.constant 1.000000e+00 : f32
    %13 = vector.broadcast %cst_10 : f32 to vector<8x128xf32>
    %14 = arith.addf %13, %12 : vector<8x128xf32>
    %15 = arith.divf %13, %14 : vector<8x128xf32>
    %16 = vector.extract_strided_slice %9 {offsets = [0, 128], sizes = [8, 128], strides = [1, 1]} : vector<8x512xf32> to vector<8x128xf32>
    %17 = arith.negf %16 : vector<8x128xf32>
    %18 = math.exp %17 : vector<8x128xf32>
    %cst_11 = arith.constant 1.000000e+00 : f32
    %19 = vector.broadcast %cst_11 : f32 to vector<8x128xf32>
    %20 = arith.addf %19, %18 : vector<8x128xf32>
    %21 = arith.divf %19, %20 : vector<8x128xf32>
    %22 = vector.extract_strided_slice %9 {offsets = [0, 256], sizes = [8, 128], strides = [1, 1]} : vector<8x512xf32> to vector<8x128xf32>
    %23 = math.tanh %22 : vector<8x128xf32>
    %24 = vector.extract_strided_slice %9 {offsets = [0, 384], sizes = [8, 128], strides = [1, 1]} : vector<8x512xf32> to vector<8x128xf32>
    %25 = arith.negf %24 : vector<8x128xf32>
    %26 = math.exp %25 : vector<8x128xf32>
    %cst_12 = arith.constant 1.000000e+00 : f32
    %27 = vector.broadcast %cst_12 : f32 to vector<8x128xf32>
    %28 = arith.addf %27, %26 : vector<8x128xf32>
    %29 = arith.divf %27, %28 : vector<8x128xf32>
    %c0_13 = arith.constant 0 : index
    %c0_14 = arith.constant 0 : index
    %30 = vector.load %arg2[%c0_13, %c0_14] : memref<8x128xf32, #tpu.memory_space<vmem>>, vector<8x128xf32>
    %31 = arith.mulf %21, %30 : vector<8x128xf32>
    %32 = arith.mulf %15, %23 : vector<8x128xf32>
    %33 = arith.addf %31, %32 : vector<8x128xf32>
    %34 = math.tanh %33 : vector<8x128xf32>
    %35 = arith.mulf %29, %34 : vector<8x128xf32>
    %c0_15 = arith.constant 0 : index
    %c0_16 = arith.constant 0 : index
    %c0_17 = arith.constant 0 : index
    %36 = vector.load %arg3[%c0_15, %c0_16, %c0_17] : memref<8x128x128xbf16, #tpu.memory_space<vmem>>, vector<8x128x128xbf16>
    %37 = arith.truncf %35 : vector<8x128xf32> to vector<8x128xbf16>
    %38 = vector.shape_cast %37 : vector<8x128xbf16> to vector<8x1x128xbf16>
    "tpu.trace_start"() <{level = 10 : i32, message = "bqh,bsh->bqs"}> : () -> ()
    %cst_18 = arith.constant dense<0.000000e+00> : vector<8x1x128xf32>
    %39 = tpu.matmul %38, %36, %cst_18 {dimension_numbers = #tpu.dot_dimension_numbers<[2], [2], [1], [1], [0, 0, 0, 1, 1, 1], [0], [0]>} : vector<8x1x128xbf16>, vector<8x128x128xbf16>, vector<8x1x128xf32> -> vector<8x1x128xf32>
    "tpu.trace_stop"() : () -> ()
    %40 = tpu.iota {dimensions = array<i32: 2>} : vector<8x1x128xi32>
    %c8_i32 = arith.constant 8 : i32
    %41 = vector.broadcast %c8_i32 : i32 to vector<8x1x128xi32>
    %42 = arith.cmpi slt, %40, %41 : vector<8x1x128xi32>
    %cst_19 = arith.constant -1.000000e+30 : f32
    %43 = vector.broadcast %cst_19 : f32 to vector<8x1x128xf32>
    %44 = arith.select %42, %39, %43 : vector<8x1x128xi1>, vector<8x1x128xf32>
    %cst_20 = arith.constant dense<0xFF800000> : vector<8x1xf32>
    %45 = vector.multi_reduction <maximumf>, %44, %cst_20 [2] : vector<8x1x128xf32> to vector<8x1xf32>
    %46 = vector.shape_cast %45 : vector<8x1xf32> to vector<8x1x1xf32>
    %47 = vector.broadcast %46 : vector<8x1x1xf32> to vector<8x1x128xf32>
    %48 = arith.subf %44, %47 : vector<8x1x128xf32>
    %49 = math.exp %48 : vector<8x1x128xf32>
    %cst_21 = arith.constant dense<0.000000e+00> : vector<8x1xf32>
    %50 = vector.multi_reduction <add>, %49, %cst_21 [2] : vector<8x1x128xf32> to vector<8x1xf32>
    %51 = vector.shape_cast %50 : vector<8x1xf32> to vector<8x1x1xf32>
    %52 = tpu.reciprocal %51 {approx = true} : vector<8x1x1xf32> -> vector<8x1x1xf32>
    %53 = vector.broadcast %52 : vector<8x1x1xf32> to vector<8x1x128xf32>
    %54 = arith.mulf %49, %53 : vector<8x1x128xf32>
    %55 = arith.truncf %54 : vector<8x1x128xf32> to vector<8x1x128xbf16>
    "tpu.trace_start"() <{level = 10 : i32, message = "bqs,bsh->bqh"}> : () -> ()
    %cst_22 = arith.constant dense<0.000000e+00> : vector<8x1x128xf32>
    %56 = tpu.matmul %55, %36, %cst_22 {dimension_numbers = #tpu.dot_dimension_numbers<[2], [1], [1], [2], [0, 0, 0, 1, 1, 2], [0], [0]>} : vector<8x1x128xbf16>, vector<8x128x128xbf16>, vector<8x1x128xf32> -> vector<8x1x128xf32>
    "tpu.trace_stop"() : () -> ()
    %57 = vector.shape_cast %56 : vector<8x1x128xf32> to vector<8x128xf32>
    %58 = arith.truncf %35 : vector<8x128xf32> to vector<8x128xbf16>
    %c0_23 = arith.constant 0 : index
    %c0_24 = arith.constant 0 : index
    %59 = vector.load %arg7[%c0_23, %c0_24] : memref<128x128xbf16, #tpu.memory_space<vmem>>, vector<128x128xbf16>
    %cst_25 = arith.constant dense<0.000000e+00> : vector<8x128xf32>
    %60 = tpu.matmul %58, %59, %cst_25 {dimension_numbers = #tpu.dot_dimension_numbers<[1], [0], [0], [1], [0, 0, 1, 1], [], []>} : vector<8x128xbf16>, vector<128x128xbf16>, vector<8x128xf32> -> vector<8x128xf32>
    %61 = arith.truncf %57 : vector<8x128xf32> to vector<8x128xbf16>
    %c0_26 = arith.constant 0 : index
    %c0_27 = arith.constant 0 : index
    %62 = vector.load %arg8[%c0_26, %c0_27] : memref<128x128xbf16, #tpu.memory_space<vmem>>, vector<128x128xbf16>
    %cst_28 = arith.constant dense<0.000000e+00> : vector<8x128xf32>
    %63 = tpu.matmul %61, %62, %cst_28 {dimension_numbers = #tpu.dot_dimension_numbers<[1], [0], [0], [1], [0, 0, 1, 1], [], []>} : vector<8x128xbf16>, vector<128x128xbf16>, vector<8x128xf32> -> vector<8x128xf32>
    %64 = arith.addf %60, %63 : vector<8x128xf32>
    %c0_29 = arith.constant 0 : index
    %c0_30 = arith.constant 0 : index
    %65 = vector.load %arg9[%c0_29, %c0_30] : memref<1x128xf32, #tpu.memory_space<vmem>>, vector<1x128xf32>
    %66 = vector.broadcast %65 : vector<1x128xf32> to vector<8x128xf32>
    %67 = arith.addf %64, %66 : vector<8x128xf32>
    %68 = math.tanh %67 : vector<8x128xf32>
    %c0_31 = arith.constant 0 : index
    %c0_32 = arith.constant 0 : index
    %69 = vector.load %arg10[%c0_31, %c0_32] : memref<8x128xf32, #tpu.memory_space<vmem>>, vector<8x128xf32>
    tpu.vector_store %arg10[%c0_31, %c0_32], %35 {strides = array<i32>} : memref<8x128xf32, #tpu.memory_space<vmem>>, vector<8x128xf32>,
    %c0_33 = arith.constant 0 : index
    %c0_34 = arith.constant 0 : index
    %70 = vector.load %arg11[%c0_33, %c0_34] : memref<8x128xf32, #tpu.memory_space<vmem>>, vector<8x128xf32>
    tpu.vector_store %arg11[%c0_33, %c0_34], %33 {strides = array<i32>} : memref<8x128xf32, #tpu.memory_space<vmem>>, vector<8x128xf32>,
    %71 = vector.shape_cast %54 : vector<8x1x128xf32> to vector<8x128xf32>
    %c0_35 = arith.constant 0 : index
    %c0_36 = arith.constant 0 : index
    %72 = vector.load %arg12[%c0_35, %c0_36] : memref<8x128xf32, #tpu.memory_space<vmem>>, vector<8x128xf32>
    tpu.vector_store %arg12[%c0_35, %c0_36], %71 {strides = array<i32>} : memref<8x128xf32, #tpu.memory_space<vmem>>, vector<8x128xf32>,
    %73 = arith.truncf %68 : vector<8x128xf32> to vector<8x128xbf16>
    %c0_37 = arith.constant 0 : index
    %c0_38 = arith.constant 0 : index
    %74 = vector.load %arg13[%c0_37, %c0_38] : memref<8x128xbf16, #tpu.memory_space<vmem>>, vector<8x128xbf16>
    tpu.vector_store %arg13[%c0_37, %c0_38], %73 {strides = array<i32>} : memref<8x128xbf16, #tpu.memory_space<vmem>>, vector<8x128xbf16>,
    return
  }
}

</mosaic_0001>

<llo_original>
// kernel: tpu_custom_call.1
$region0: #{tpu_custom_call.1}
  #allocation0 [shape = 'u32[]', space=smem, size = 0x4, offset = 0x4, fixed_abs, tag = 'smem constant byte address 0x4 - core index']
  #allocation1 [shape = 'u32[72,128]{1,0:T(1,128)}', space=vmem, size = 0x9000, scoped, tag = 'internal scratch']
  %s0 = inlined_call_operand.hbm [shape: bf16[8,128], index: 0, kind: input, shape index: {}]
  %s1 = inlined_call_operand.hbm [shape: bf16[8,128], index: 1, kind: input, shape index: {}]
  %s2 = inlined_call_operand.hbm [shape: f32[8,128], index: 2, kind: input, shape index: {}]
  %s3 = inlined_call_operand.hbm [shape: bf16[8,128,128], index: 3, kind: input, shape index: {}]
  %s4 = inlined_call_operand.hbm [shape: bf16[128,512], index: 4, kind: input, shape index: {}]
  %s5 = inlined_call_operand.hbm [shape: bf16[128,512], index: 5, kind: input, shape index: {}]
  %s6 = inlined_call_operand.vmem [shape: f32[1,512], index: 6, kind: input, shape index: {}]
  %s7 = inlined_call_operand.hbm [shape: bf16[128,128], index: 7, kind: input, shape index: {}]
  %s8 = inlined_call_operand.hbm [shape: bf16[128,128], index: 8, kind: input, shape index: {}]
  %s9 = inlined_call_operand.vmem [shape: f32[1,128], index: 9, kind: input, shape index: {}]
  %s10 = inlined_call_operand.hbm [shape: f32[8,128], index: 10, kind: output, shape index: {0}]
  %s11 = inlined_call_operand.hbm [shape: f32[8,128], index: 11, kind: output, shape index: {1}]
  %s12 = inlined_call_operand.hbm [shape: f32[8,128], index: 12, kind: output, shape index: {2}]
  %s13 = inlined_call_operand.hbm [shape: bf16[8,128], index: 13, kind: output, shape index: {3}]
  %14 = xla_tuple %s10, %s11, %s12, %s13
  %s15 = sld [smem:[#allocation0]]
  $region106: #{tpu_custom_call.1} parent=0
    _
  %s17 = ssub.s32 1, %s15
  %s18 = scalar_select 0, %s17, %s15
  $region1: #{tpu_custom_call.1} parent=0
    #allocation2 [shape = 'u8[2048]{0}', space=vmem, size = 0x800, scoped, tag = 'input window, operand 0, single buffered']
    #allocation3 [shape = 's32[1]{0}', space=sflag, size = 0x4, scoped, tag = 'scoped memory for tpu_custom_call.1']
    #allocation4 [shape = 's32[1]{0}', space=sflag, size = 0x4, scoped, tag = 'scoped memory for tpu_custom_call.1']
    #allocation5 [shape = 'u8[2048]{0}', space=vmem, size = 0x800, scoped, tag = 'input window, operand 1, single buffered']
    #allocation6 [shape = 's32[1]{0}', space=sflag, size = 0x4, scoped, tag = 'scoped memory for tpu_custom_call.1']
    #allocation7 [shape = 'u8[4096]{0}', space=vmem, size = 0x1000, scoped, tag = 'input window, operand 2, single buffered']
    #allocation8 [shape = 'u8[262144]{0}', space=vmem, size = 0x40000, scoped, tag = 'input window, operand 3, single buffered']
    #allocation9 [shape = 's32[1]{0}', space=sflag, size = 0x4, scoped, tag = 'scoped memory for tpu_custom_call.1']
    #allocation10 [shape = 'u8[131072]{0}', space=vmem, size = 0x20000, scoped, tag = 'input window, operand 4, single buffered']
    #allocation11 [shape = 'u8[131072]{0}', space=vmem, size = 0x20000, scoped, tag = 'input window, operand 5, single buffered']
    #allocation12 [shape = 's32[1]{0}', space=sflag, size = 0x4, scoped, tag = 'scoped memory for tpu_custom_call.1']
    #allocation13 [shape = 'u8[32768]{0}', space=vmem, size = 0x8000, scoped, tag = 'input window, operand 7, single buffered']
    #allocation14 [shape = 'u8[32768]{0}', space=vmem, size = 0x8000, scoped, tag = 'input window, operand 8, single buffered']
    #allocation15 [shape = 's32[1]{0}', space=sflag, size = 0x4, scoped, tag = 'scoped memory for tpu_custom_call.1']
    #allocation16 [shape = 'u8[4096]{0}', space=vmem, size = 0x1000, scoped, tag = 'output window, operand 0, single buffered']
    #allocation17 [shape = 'u8[4096]{0}', space=vmem, size = 0x1000, scoped, tag = 'output window, operand 1, single buffered']
    #allocation18 [shape = 's32[1]{0}', space=sflag, size = 0x4, scoped, tag = 'scoped memory for tpu_custom_call.1']
    #allocation19 [shape = 'u8[4096]{0}', space=vmem, size = 0x1000, scoped, tag = 'output window, operand 2, single buffered']
    #allocation20 [shape = 'u8[2048]{0}', space=vmem, size = 0x800, scoped, tag = 'output window, operand 3, single buffered']
    #allocation21 [shape = 's32[1]{0}', space=sflag, size = 0x4, scoped, tag = 'scoped memory for tpu_custom_call.1']
    %19 = vsyncpa [#allocation3], 0
    %20 = vsyncpa [#allocation6], 0
    %21 = vsyncpa [#allocation9], 0
    %22 = vsyncpa [#allocation12], 0
    %23 = vsyncpa [#allocation15], 0
    %24 = vsyncpa [#allocation4], 0
    %25 = vsyncpa [#allocation18], 0
    %26 = vsyncpa [#allocation21], 0
    // Predicated region
    $region2: #{tpu_custom_call.1} parent=1 // pred_check
      _
    $region3: #{tpu_custom_call.1} parent=1 // pred_check_branch
      %28 = sbr.rel (0) target = $region5
    $region4: #{tpu_custom_call.1} parent=1 // pred_region
      %30 = vsyncadd [#allocation3], 0
      %s32 = sshll.u32 %s0, 4
      %s33 = int_to_ptr.hbm [resolvable:$true] %s32
      %s34 = sshll.u32 [#allocation2], 4
      %s35 = int_to_ptr.vmem [resolvable:$true] %s34
      %37 = dma.hbm_to_vmem [thread:$0]  %s33, 64, %s35, [#allocation3]
    $region5: #{tpu_custom_call.1} parent=1 // pred_fallthru
      _
    // Predicated region
    $region6: #{tpu_custom_call.1} parent=1 // pred_check
      _
    $region7: #{tpu_custom_call.1} parent=1 // pred_check_branch
      %39 = sbr.rel (0) target = $region9
    $region8: #{tpu_custom_call.1} parent=1 // pred_region
      %41 = vsyncadd [#allocation6], 0
      %s43 = sshll.u32 %s1, 4
      %s44 = int_to_ptr.hbm [resolvable:$true] %s43
      %s45 = sshll.u32 [#allocation5], 4
      %s46 = int_to_ptr.vmem [resolvable:$true] %s45
      %48 = dma.hbm_to_vmem [thread:$0]  %s44, 64, %s46, [#allocation6]
    $region9: #{tpu_custom_call.1} parent=1 // pred_fallthru
      _
    // Predicated region
    $region10: #{tpu_custom_call.1} parent=1 // pred_check
      _
    $region11: #{tpu_custom_call.1} parent=1 // pred_check_branch
      %50 = sbr.rel (0) target = $region13
    $region12: #{tpu_custom_call.1} parent=1 // pred_region
      %52 = vsyncadd [#allocation6], 0
      %s54 = sshll.u32 %s2, 4
      %s55 = int_to_ptr.hbm [resolvable:$true] %s54
      %s56 = sshll.u32 [#allocation7], 4
      %s57 = int_to_ptr.vmem [resolvable:$true] %s56
      %59 = dma.hbm_to_vmem [thread:$0]  %s55, 128, %s57, [#allocation6]
    $region13: #{tpu_custom_call.1} parent=1 // pred_fallthru
      _
    // Predicated region
    $region14: #{tpu_custom_call.1} parent=1 // pred_check
      _
    $region15: #{tpu_custom_call.1} parent=1 // pred_check_branch
      %61 = sbr.rel (0) target = $region17
    $region16: #{tpu_custom_call.1} parent=1 // pred_region
      %63 = vsyncadd [#allocation9], 0
      %s64 = sshll.u32 %s3, 4
      %s65 = int_to_ptr.hbm [resolvable:$true] %s64
      %s66 = sshll.u32 [#allocation8], 4
      %s67 = int_to_ptr.vmem [resolvable:$true] %s66
      %72 = dma.hbm_to_vmem [thread:$0]  %s65, 8192, %s67, [#allocation9], 64, 64, 4
    $region17: #{tpu_custom_call.1} parent=1 // pred_fallthru
      _
    // Predicated region
    $region18: #{tpu_custom_call.1} parent=1 // pred_check
      _
    $region19: #{tpu_custom_call.1} parent=1 // pred_check_branch
      %74 = sbr.rel (0) target = $region21
    $region20: #{tpu_custom_call.1} parent=1 // pred_region
      %76 = vsyncadd [#allocation9], 0
      %s77 = sshll.u32 %s4, 4
      %s78 = int_to_ptr.hbm [resolvable:$true] %s77
      %s79 = sshll.u32 [#allocation10], 4
      %s80 = int_to_ptr.vmem [resolvable:$true] %s79
      %85 = dma.hbm_to_vmem [thread:$0]  %s78, 4096, %s80, [#allocation9], 256, 256, 16
    $region21: #{tpu_custom_call.1} parent=1 // pred_fallthru
      _
    // Predicated region
    $region22: #{tpu_custom_call.1} parent=1 // pred_check
      _
    $region23: #{tpu_custom_call.1} parent=1 // pred_check_branch
      %87 = sbr.rel (0) target = $region25
    $region24: #{tpu_custom_call.1} parent=1 // pred_region
      %89 = vsyncadd [#allocation12], 0
      %s90 = sshll.u32 %s5, 4
      %s91 = int_to_ptr.hbm [resolvable:$true] %s90
      %s92 = sshll.u32 [#allocation11], 4
      %s93 = int_to_ptr.vmem [resolvable:$true] %s92
      %98 = dma.hbm_to_vmem [thread:$0]  %s91, 4096, %s93, [#allocation12], 256, 256, 16
    $region25: #{tpu_custom_call.1} parent=1 // pred_fallthru
      _
    // Predicated region
    $region26: #{tpu_custom_call.1} parent=1 // pred_check
      _
    $region27: #{tpu_custom_call.1} parent=1 // pred_check_branch
      %100 = sbr.rel (0) target = $region29
    $region28: #{tpu_custom_call.1} parent=1 // pred_region
      _
    $region29: #{tpu_custom_call.1} parent=1 // pred_fallthru
      _
    // Predicated region
    $region30: #{tpu_custom_call.1} parent=1 // pred_check
      _
    $region31: #{tpu_custom_call.1} parent=1 // pred_check_branch
      %102 = sbr.rel (0) target = $region33
    $region32: #{tpu_custom_call.1} parent=1 // pred_region
      %104 = vsyncadd [#allocation12], 0
      %s105 = sshll.u32 %s7, 4
      %s106 = int_to_ptr.hbm [resolvable:$true] %s105
      %s107 = sshll.u32 [#allocation13], 4
      %s108 = int_to_ptr.vmem [resolvable:$true] %s107
      %113 = dma.hbm_to_vmem [thread:$0]  %s106, 1024, %s108, [#allocation12], 64, 64, 4
    $region33: #{tpu_custom_call.1} parent=1 // pred_fallthru
      _
    // Predicated region
    $region34: #{tpu_custom_call.1} parent=1 // pred_check
      _
    $region35: #{tpu_custom_call.1} parent=1 // pred_check_branch
      %115 = sbr.rel (0) target = $region37
    $region36: #{tpu_custom_call.1} parent=1 // pred_region
      %117 = vsyncadd [#allocation15], 0
      %s118 = sshll.u32 %s8, 4
      %s119 = int_to_ptr.hbm [resolvable:$true] %s118
      %s120 = sshll.u32 [#allocation14], 4
      %s121 = int_to_ptr.vmem [resolvable:$true] %s120
      %126 = dma.hbm_to_vmem [thread:$0]  %s119, 1024, %s121, [#allocation15], 64, 64, 4
    $region37: #{tpu_custom_call.1} parent=1 // pred_fallthru
      _
    // Predicated region
    $region38: #{tpu_custom_call.1} parent=1 // pred_check
      _
    $region39: #{tpu_custom_call.1} parent=1 // pred_check_branch
      %128 = sbr.rel (0) target = $region41
    $region40: #{tpu_custom_call.1} parent=1 // pred_region
      _
    $region41: #{tpu_custom_call.1} parent=1 // pred_fallthru
      _
    // Predicated region
    $region42: #{tpu_custom_call.1} parent=1 // pred_check
      _
    $region43: #{tpu_custom_call.1} parent=1 // pred_check_branch
      %130 = sbr.rel (0) target = $region45
    $region44: #{tpu_custom_call.1} parent=1 // pred_region
      %132 = dma.done [#allocation3], 64
    $region45: #{tpu_custom_call.1} parent=1 // pred_fallthru
      _
    // Predicated region
    $region46: #{tpu_custom_call.1} parent=1 // pred_check
      _
    $region47: #{tpu_custom_call.1} parent=1 // pred_check_branch
      %134 = sbr.rel (0) target = $region49
    $region48: #{tpu_custom_call.1} parent=1 // pred_region
      %136 = dma.done [#allocation6], 64
    $region49: #{tpu_custom_call.1} parent=1 // pred_fallthru
      _
    // Predicated region
    $region50: #{tpu_custom_call.1} parent=1 // pred_check
      _
    $region51: #{tpu_custom_call.1} parent=1 // pred_check_branch
      %138 = sbr.rel (0) target = $region53
    $region52: #{tpu_custom_call.1} parent=1 // pred_region
      %140 = dma.done [#allocation6], 128
    $region53: #{tpu_custom_call.1} parent=1 // pred_fallthru
      _
    // Predicated region
    $region54: #{tpu_custom_call.1} parent=1 // pred_check
      _
    $region55: #{tpu_custom_call.1} parent=1 // pred_check_branch
      %142 = sbr.rel (0) target = $region57
    $region56: #{tpu_custom_call.1} parent=1 // pred_region
      %144 = dma.done [#allocation9], 8192
    $region57: #{tpu_custom_call.1} parent=1 // pred_fallthru
      _
    // Predicated region
    $region58: #{tpu_custom_call.1} parent=1 // pred_check
      _
    $region59: #{tpu_custom_call.1} parent=1 // pred_check_branch
      %146 = sbr.rel (0) target = $region61
    $region60: #{tpu_custom_call.1} parent=1 // pred_region
      %148 = dma.done [#allocation9], 4096
    $region61: #{tpu_custom_call.1} parent=1 // pred_fallthru
      _
    // Predicated region
    $region62: #{tpu_custom_call.1} parent=1 // pred_check
      _
    $region63: #{tpu_custom_call.1} parent=1 // pred_check_branch
      %150 = sbr.rel (0) target = $region65
    $region64: #{tpu_custom_call.1} parent=1 // pred_region
      %152 = dma.done [#allocation12], 4096
    $region65: #{tpu_custom_call.1} parent=1 // pred_fallthru
      _
    // Predicated region
    $region66: #{tpu_custom_call.1} parent=1 // pred_check
      _
    $region67: #{tpu_custom_call.1} parent=1 // pred_check_branch
      %154 = sbr.rel (0) target = $region69
    $region68: #{tpu_custom_call.1} parent=1 // pred_region
      %156 = dma.done [#allocation12], 1024
    $region69: #{tpu_custom_call.1} parent=1 // pred_fallthru
      _
    // Predicated region
    $region70: #{tpu_custom_call.1} parent=1 // pred_check
      _
    $region71: #{tpu_custom_call.1} parent=1 // pred_check_branch
      %158 = sbr.rel (0) target = $region73
    $region72: #{tpu_custom_call.1} parent=1 // pred_region
      %160 = dma.done [#allocation15], 1024
    $region73: #{tpu_custom_call.1} parent=1 // pred_fallthru
      _
    %v161 = vld [vmem:[#allocation2] sm:$0xf]
    %v162 = vld [vmem:[#allocation10] sm:$0xff]
    %v163 = vld [vmem:[#allocation10 + $0x8] sm:$0xff]
    %v164 = vld [vmem:[#allocation10 + $0x10] sm:$0xff]
    %v165 = vld [vmem:[#allocation10 + $0x18] sm:$0xff]
    %v166 = vld [vmem:[#allocation10 + $0x20] sm:$0xff]
    %v167 = vld [vmem:[#allocation10 + $0x28] sm:$0xff]
    %v168 = vld [vmem:[#allocation10 + $0x30] sm:$0xff]
    %v169 = vld [vmem:[#allocation10 + $0x38] sm:$0xff]
    %v170 = vld [vmem:[#allocation10 + $0x40] sm:$0xff]
    %v171 = vld [vmem:[#allocation10 + $0x48] sm:$0xff]
    %v172 = vld [vmem:[#allocation10 + $0x50] sm:$0xff]
    %v173 = vld [vmem:[#allocation10 + $0x58] sm:$0xff]
    %v174 = vld [vmem:[#allocation10 + $0x60] sm:$0xff]
    %v175 = vld [vmem:[#allocation10 + $0x68] sm:$0xff]
    %v176 = vld [vmem:[#allocation10 + $0x70] sm:$0xff]
    %v177 = vld [vmem:[#allocation10 + $0x78] sm:$0xff]
    %v178 = vld [vmem:[#allocation10 + $0x80] sm:$0xff]
    %v179 = vld [vmem:[#allocation10 + $0x88] sm:$0xff]
    %v180 = vld [vmem:[#allocation10 + $0x90] sm:$0xff]
    %v181 = vld [vmem:[#allocation10 + $0x98] sm:$0xff]
    %v182 = vld [vmem:[#allocation10 + $0xa0] sm:$0xff]
    %v183 = vld [vmem:[#allocation10 + $0xa8] sm:$0xff]
    %v184 = vld [vmem:[#allocation10 + $0xb0] sm:$0xff]
    %v185 = vld [vmem:[#allocation10 + $0xb8] sm:$0xff]
    %v186 = vld [vmem:[#allocation10 + $0xc0] sm:$0xff]
    %v187 = vld [vmem:[#allocation10 + $0xc8] sm:$0xff]
    %v188 = vld [vmem:[#allocation10 + $0xd0] sm:$0xff]
    %v189 = vld [vmem:[#allocation10 + $0xd8] sm:$0xff]
    %v190 = vld [vmem:[#allocation10 + $0xe0] sm:$0xff]
    %v191 = vld [vmem:[#allocation10 + $0xe8] sm:$0xff]
    %v192 = vld [vmem:[#allocation10 + $0xf0] sm:$0xff]
    %v193 = vld [vmem:[#allocation10 + $0xf8] sm:$0xff]
    %v194 = vld [vmem:[#allocation5] sm:$0xf]
    %v195 = vld [vmem:[#allocation11] sm:$0xff]
    %v196 = vld [vmem:[#allocation11 + $0x8] sm:$0xff]
    %v197 = vld [vmem:[#allocation11 + $0x10] sm:$0xff]
    %v198 = vld [vmem:[#allocation11 + $0x18] sm:$0xff]
    %v199 = vld [vmem:[#allocation11 + $0x20] sm:$0xff]
    %v200 = vld [vmem:[#allocation11 + $0x28] sm:$0xff]
    %v201 = vld [vmem:[#allocation11 + $0x30] sm:$0xff]
    %v202 = vld [vmem:[#allocation11 + $0x38] sm:$0xff]
    %v203 = vld [vmem:[#allocation11 + $0x40] sm:$0xff]
    %v204 = vld [vmem:[#allocation11 + $0x48] sm:$0xff]
    %v205 = vld [vmem:[#allocation11 + $0x50] sm:$0xff]
    %v206 = vld [vmem:[#allocation11 + $0x58] sm:$0xff]
    %v207 = vld [vmem:[#allocation11 + $0x60] sm:$0xff]
    %v208 = vld [vmem:[#allocation11 + $0x68] sm:$0xff]
    %v209 = vld [vmem:[#allocation11 + $0x70] sm:$0xff]
    %v210 = vld [vmem:[#allocation11 + $0x78] sm:$0xff]
    %v211 = vld [vmem:[#allocation11 + $0x80] sm:$0xff]
    %v212 = vld [vmem:[#allocation11 + $0x88] sm:$0xff]
    %v213 = vld [vmem:[#allocation11 + $0x90] sm:$0xff]
    %v214 = vld [vmem:[#allocation11 + $0x98] sm:$0xff]
    %v215 = vld [vmem:[#allocation11 + $0xa0] sm:$0xff]
    %v216 = vld [vmem:[#allocation11 + $0xa8] sm:$0xff]
    %v217 = vld [vmem:[#allocation11 + $0xb0] sm:$0xff]
    %v218 = vld [vmem:[#allocation11 + $0xb8] sm:$0xff]
    %v219 = vld [vmem:[#allocation11 + $0xc0] sm:$0xff]
    %v220 = vld [vmem:[#allocation11 + $0xc8] sm:$0xff]
    %v221 = vld [vmem:[#allocation11 + $0xd0] sm:$0xff]
    %v222 = vld [vmem:[#allocation11 + $0xd8] sm:$0xff]
    %v223 = vld [vmem:[#allocation11 + $0xe0] sm:$0xff]
    %v224 = vld [vmem:[#allocation11 + $0xe8] sm:$0xff]
    %v225 = vld [vmem:[#allocation11 + $0xf0] sm:$0xff]
    %v226 = vld [vmem:[#allocation11 + $0xf8] sm:$0xff]
    %v259 = vunpack.c.l.b16 %v195
    %v260 = vunpack.c.h.b16 %v195
    %v261 = vunpack.c.l.b16 %v196
    %v262 = vunpack.c.h.b16 %v196
    %v263 = vunpack.c.l.b16 %v197
    %v264 = vunpack.c.h.b16 %v197
    %v265 = vunpack.c.l.b16 %v198
    %v266 = vunpack.c.h.b16 %v198
    %v267 = vunpack.c.l.b16 %v199
    %v268 = vunpack.c.h.b16 %v199
    %v269 = vunpack.c.l.b16 %v200
    %v270 = vunpack.c.h.b16 %v200
    %v271 = vunpack.c.l.b16 %v201
    %v272 = vunpack.c.h.b16 %v201
    %v273 = vunpack.c.l.b16 %v202
    %v274 = vunpack.c.h.b16 %v202
    %v275 = vunpack.c.l.b16 %v203
    %v276 = vunpack.c.h.b16 %v203
    %v277 = vunpack.c.l.b16 %v204
    %v278 = vunpack.c.h.b16 %v204
    %v279 = vunpack.c.l.b16 %v205
    %v280 = vunpack.c.h.b16 %v205
    %v281 = vunpack.c.l.b16 %v206
    %v282 = vunpack.c.h.b16 %v206
    %v283 = vunpack.c.l.b16 %v207
    %v284 = vunpack.c.h.b16 %v207
    %v285 = vunpack.c.l.b16 %v208
    %v286 = vunpack.c.h.b16 %v208
    %v287 = vunpack.c.l.b16 %v209
    %v288 = vunpack.c.h.b16 %v209
    %v289 = vunpack.c.l.b16 %v210
    %v290 = vunpack.c.h.b16 %v210
    %v291 = vunpack.c.l.b16 %v211
    %v292 = vunpack.c.h.b16 %v211
    %v293 = vunpack.c.l.b16 %v212
    %v294 = vunpack.c.h.b16 %v212
    %v295 = vunpack.c.l.b16 %v213
    %v296 = vunpack.c.h.b16 %v213
    %v297 = vunpack.c.l.b16 %v214
    %v298 = vunpack.c.h.b16 %v214
    %v299 = vunpack.c.l.b16 %v215
    %v300 = vunpack.c.h.b16 %v215
    %v301 = vunpack.c.l.b16 %v216
    %v302 = vunpack.c.h.b16 %v216
    %v303 = vunpack.c.l.b16 %v217
    %v304 = vunpack.c.h.b16 %v217
    %v305 = vunpack.c.l.b16 %v218
    %v306 = vunpack.c.h.b16 %v218
    %v307 = vunpack.c.l.b16 %v219
    %v308 = vunpack.c.h.b16 %v219
    %v309 = vunpack.c.l.b16 %v220
    %v310 = vunpack.c.h.b16 %v220
    %v311 = vunpack.c.l.b16 %v221
    %v312 = vunpack.c.h.b16 %v221
    %v313 = vunpack.c.l.b16 %v222
    %v314 = vunpack.c.h.b16 %v222
    %v315 = vunpack.c.l.b16 %v223
    %v316 = vunpack.c.h.b16 %v223
    %v317 = vunpack.c.l.b16 %v224
    %v318 = vunpack.c.h.b16 %v224
    %v319 = vunpack.c.l.b16 %v225
    %v320 = vunpack.c.h.b16 %v225
    %v321 = vunpack.c.l.b16 %v226
    %v322 = vunpack.c.h.b16 %v226
    %v323 = vpack.c.b16 %v263, %v259
    %v324 = vpack.c.b16 %v264, %v260
    %v325 = vpack.c.b16 %v265, %v261
    %v326 = vpack.c.b16 %v266, %v262
    %v327 = vpack.c.b16 %v271, %v267
    %v328 = vpack.c.b16 %v272, %v268
    %v329 = vpack.c.b16 %v273, %v269
    %v330 = vpack.c.b16 %v274, %v270
    %v331 = vpack.c.b16 %v279, %v275
    %v332 = vpack.c.b16 %v280, %v276
    %v333 = vpack.c.b16 %v281, %v277
    %v334 = vpack.c.b16 %v282, %v278
    %v335 = vpack.c.b16 %v287, %v283
    %v336 = vpack.c.b16 %v288, %v284
    %v337 = vpack.c.b16 %v289, %v285
    %v338 = vpack.c.b16 %v290, %v286
    %v339 = vpack.c.b16 %v295, %v291
    %v340 = vpack.c.b16 %v296, %v292
    %v341 = vpack.c.b16 %v297, %v293
    %v342 = vpack.c.b16 %v298, %v294
    %v343 = vpack.c.b16 %v303, %v299
    %v344 = vpack.c.b16 %v304, %v300
    %v345 = vpack.c.b16 %v305, %v301
    %v346 = vpack.c.b16 %v306, %v302
    %v347 = vpack.c.b16 %v311, %v307
    %v348 = vpack.c.b16 %v312, %v308
    %v349 = vpack.c.b16 %v313, %v309
    %v350 = vpack.c.b16 %v314, %v310
    %v351 = vpack.c.b16 %v319, %v315
    %v352 = vpack.c.b16 %v320, %v316
    %v353 = vpack.c.b16 %v321, %v317
    %v354 = vpack.c.b16 %v322, %v318
    %387 = vmatpush.bf16.msra.mxu0 %v351
    %388 = vmatpush.bf16.msra.mxu0 %v347
    %389 = vmatpush.bf16.msra.mxu0 %v343
    %390 = vmatpush.bf16.msra.mxu0 %v339
    %391 = vmatpush.bf16.msra.mxu0 %v335
    %392 = vmatpush.bf16.msra.mxu0 %v331
    %393 = vmatpush.bf16.msra.mxu0 %v327
    %394 = vmatpush.bf16.msra.mxu0 %v323
    %395 = vmatmul.bf16.gmra.mxu0 %v194
    %v396 = vpop.f32.mrf.mxu0
    %v397 = vadd.f32 0.0, %v396
    %v398 = vpop.f32.mrf.mxu0
    %399 = vdwg.mxu0
    %400 = vmatpush.bf16.msra.mxu0 %v352
    %401 = vmatpush.bf16.msra.mxu0 %v348
    %402 = vmatpush.bf16.msra.mxu0 %v344
    %403 = vmatpush.bf16.msra.mxu0 %v340
    %404 = vmatpush.bf16.msra.mxu0 %v336
    %405 = vmatpush.bf16.msra.mxu0 %v332
    %406 = vmatpush.bf16.msra.mxu0 %v328
    %407 = vmatpush.bf16.msra.mxu0 %v324
    %408 = vmatmul.bf16.gmra.mxu0 %v194
    %v409 = vpop.f32.mrf.mxu0
    %v410 = vadd.f32 0.0, %v409
    %v411 = vpop.f32.mrf.mxu0
    %412 = vdwg.mxu0
    %413 = vmatpush.bf16.msra.mxu0 %v353
    %414 = vmatpush.bf16.msra.mxu0 %v349
    %415 = vmatpush.bf16.msra.mxu0 %v345
    %416 = vmatpush.bf16.msra.mxu0 %v341
    %417 = vmatpush.bf16.msra.mxu0 %v337
    %418 = vmatpush.bf16.msra.mxu0 %v333
    %419 = vmatpush.bf16.msra.mxu0 %v329
    %420 = vmatpush.bf16.msra.mxu0 %v325
    %421 = vmatmul.bf16.gmra.mxu0 %v194
    %v422 = vpop.f32.mrf.mxu0
    %v423 = vadd.f32 0.0, %v422
    %v424 = vpop.f32.mrf.mxu0
    %425 = vdwg.mxu0
    %426 = vmatpush.bf16.msra.mxu0 %v354
    %427 = vmatpush.bf16.msra.mxu0 %v350
    %428 = vmatpush.bf16.msra.mxu0 %v346
    %429 = vmatpush.bf16.msra.mxu0 %v342
    %430 = vmatpush.bf16.msra.mxu0 %v338
    %431 = vmatpush.bf16.msra.mxu0 %v334
    %432 = vmatpush.bf16.msra.mxu0 %v330
    %433 = vmatpush.bf16.msra.mxu0 %v326
    %434 = vmatmul.bf16.gmra.mxu0 %v194
    %v435 = vpop.f32.mrf.mxu0
    %v436 = vadd.f32 0.0, %v435
    %v437 = vpop.f32.mrf.mxu0
    %438 = vdwg.mxu0
    %v471 = vunpack.c.l.b16 %v162
    %v472 = vunpack.c.h.b16 %v162
    %v473 = vunpack.c.l.b16 %v163
    %v474 = vunpack.c.h.b16 %v163
    %v475 = vunpack.c.l.b16 %v164
    %v476 = vunpack.c.h.b16 %v164
    %v477 = vunpack.c.l.b16 %v165
    %v478 = vunpack.c.h.b16 %v165
    %v479 = vunpack.c.l.b16 %v166
    %v480 = vunpack.c.h.b16 %v166
    %v481 = vunpack.c.l.b16 %v167
    %v482 = vunpack.c.h.b16 %v167
    %v483 = vunpack.c.l.b16 %v168
    %v484 = vunpack.c.h.b16 %v168
    %v485 = vunpack.c.l.b16 %v169
    %v486 = vunpack.c.h.b16 %v169
    %v487 = vunpack.c.l.b16 %v170
    %v488 = vunpack.c.h.b16 %v170
    %v489 = vunpack.c.l.b16 %v171
    %v490 = vunpack.c.h.b16 %v171
    %v491 = vunpack.c.l.b16 %v172
    %v492 = vunpack.c.h.b16 %v172
    %v493 = vunpack.c.l.b16 %v173
    %v494 = vunpack.c.h.b16 %v173
    %v495 = vunpack.c.l.b16 %v174
    %v496 = vunpack.c.h.b16 %v174
    %v497 = vunpack.c.l.b16 %v175
    %v498 = vunpack.c.h.b16 %v175
    %v499 = vunpack.c.l.b16 %v176
    %v500 = vunpack.c.h.b16 %v176
    %v501 = vunpack.c.l.b16 %v177
    %v502 = vunpack.c.h.b16 %v177
    %v503 = vunpack.c.l.b16 %v178
    %v504 = vunpack.c.h.b16 %v178
    %v505 = vunpack.c.l.b16 %v179
    %v506 = vunpack.c.h.b16 %v179
    %v507 = vunpack.c.l.b16 %v180
    %v508 = vunpack.c.h.b16 %v180
    %v509 = vunpack.c.l.b16 %v181
    %v510 = vunpack.c.h.b16 %v181
    %v511 = vunpack.c.l.b16 %v182
    %v512 = vunpack.c.h.b16 %v182
    %v513 = vunpack.c.l.b16 %v183
    %v514 = vunpack.c.h.b16 %v183
    %v515 = vunpack.c.l.b16 %v184
    %v516 = vunpack.c.h.b16 %v184
    %v517 = vunpack.c.l.b16 %v185
    %v518 = vunpack.c.h.b16 %v185
    %v519 = vunpack.c.l.b16 %v186
    %v520 = vunpack.c.h.b16 %v186
    %v521 = vunpack.c.l.b16 %v187
    %v522 = vunpack.c.h.b16 %v187
    %v523 = vunpack.c.l.b16 %v188
    %v524 = vunpack.c.h.b16 %v188
    %v525 = vunpack.c.l.b16 %v189
    %v526 = vunpack.c.h.b16 %v189
    %v527 = vunpack.c.l.b16 %v190
    %v528 = vunpack.c.h.b16 %v190
    %v529 = vunpack.c.l.b16 %v191
    %v530 = vunpack.c.h.b16 %v191
    %v531 = vunpack.c.l.b16 %v192
    %v532 = vunpack.c.h.b16 %v192
    %v533 = vunpack.c.l.b16 %v193
    %v534 = vunpack.c.h.b16 %v193
    %v535 = vpack.c.b16 %v475, %v471
    %v536 = vpack.c.b16 %v476, %v472
    %v537 = vpack.c.b16 %v477, %v473
    %v538 = vpack.c.b16 %v478, %v474
    %v539 = vpack.c.b16 %v483, %v479
    %v540 = vpack.c.b16 %v484, %v480
    %v541 = vpack.c.b16 %v485, %v481
    %v542 = vpack.c.b16 %v486, %v482
    %v543 = vpack.c.b16 %v491, %v487
    %v544 = vpack.c.b16 %v492, %v488
    %v545 = vpack.c.b16 %v493, %v489
    %v546 = vpack.c.b16 %v494, %v490
    %v547 = vpack.c.b16 %v499, %v495
    %v548 = vpack.c.b16 %v500, %v496
    %v549 = vpack.c.b16 %v501, %v497
    %v550 = vpack.c.b16 %v502, %v498
    %v551 = vpack.c.b16 %v507, %v503
    %v552 = vpack.c.b16 %v508, %v504
    %v553 = vpack.c.b16 %v509, %v505
    %v554 = vpack.c.b16 %v510, %v506
    %v555 = vpack.c.b16 %v515, %v511
    %v556 = vpack.c.b16 %v516, %v512
    %v557 = vpack.c.b16 %v517, %v513
    %v558 = vpack.c.b16 %v518, %v514
    %v559 = vpack.c.b16 %v523, %v519
    %v560 = vpack.c.b16 %v524, %v520
    %v561 = vpack.c.b16 %v525, %v521
    %v562 = vpack.c.b16 %v526, %v522
    %v563 = vpack.c.b16 %v531, %v527
    %v564 = vpack.c.b16 %v532, %v528
    %v565 = vpack.c.b16 %v533, %v529
    %v566 = vpack.c.b16 %v534, %v530
    %599 = vmatpush.bf16.msra.mxu0 %v563
    %600 = vmatpush.bf16.msra.mxu0 %v559
    %601 = vmatpush.bf16.msra.mxu0 %v555
    %602 = vmatpush.bf16.msra.mxu0 %v551
    %603 = vmatpush.bf16.msra.mxu0 %v547
    %604 = vmatpush.bf16.msra.mxu0 %v543
    %605 = vmatpush.bf16.msra.mxu0 %v539
    %606 = vmatpush.bf16.msra.mxu0 %v535
    %607 = vmatmul.bf16.gmra.mxu0 %v161
    %v608 = vpop.f32.mrf.mxu0
    %v609 = vadd.f32 %v397, %v608
    %v610 = vpop.f32.mrf.mxu0
    %611 = vdwg.mxu0
    %612 = vmatpush.bf16.msra.mxu0 %v564
    %613 = vmatpush.bf16.msra.mxu0 %v560
    %614 = vmatpush.bf16.msra.mxu0 %v556
    %615 = vmatpush.bf16.msra.mxu0 %v552
    %616 = vmatpush.bf16.msra.mxu0 %v548
    %617 = vmatpush.bf16.msra.mxu0 %v544
    %618 = vmatpush.bf16.msra.mxu0 %v540
    %619 = vmatpush.bf16.msra.mxu0 %v536
    %620 = vmatmul.bf16.gmra.mxu0 %v161
    %v621 = vpop.f32.mrf.mxu0
    %v622 = vadd.f32 %v410, %v621
    %v623 = vpop.f32.mrf.mxu0
    %624 = vdwg.mxu0
    %625 = vmatpush.bf16.msra.mxu0 %v565
    %626 = vmatpush.bf16.msra.mxu0 %v561
    %627 = vmatpush.bf16.msra.mxu0 %v557
    %628 = vmatpush.bf16.msra.mxu0 %v553
    %629 = vmatpush.bf16.msra.mxu0 %v549
    %630 = vmatpush.bf16.msra.mxu0 %v545
    %631 = vmatpush.bf16.msra.mxu0 %v541
    %632 = vmatpush.bf16.msra.mxu0 %v537
    %633 = vmatmul.bf16.gmra.mxu0 %v161
    %v634 = vpop.f32.mrf.mxu0
    %v635 = vadd.f32 %v423, %v634
    %v636 = vpop.f32.mrf.mxu0
    %637 = vdwg.mxu0
    %638 = vmatpush.bf16.msra.mxu0 %v566
    %639 = vmatpush.bf16.msra.mxu0 %v562
    %640 = vmatpush.bf16.msra.mxu0 %v558
    %641 = vmatpush.bf16.msra.mxu0 %v554
    %642 = vmatpush.bf16.msra.mxu0 %v550
    %643 = vmatpush.bf16.msra.mxu0 %v546
    %644 = vmatpush.bf16.msra.mxu0 %v542
    %645 = vmatpush.bf16.msra.mxu0 %v538
    %646 = vmatmul.bf16.gmra.mxu0 %v161
    %v647 = vpop.f32.mrf.mxu0
    %v648 = vadd.f32 %v436, %v647
    %v649 = vpop.f32.mrf.mxu0
    %650 = vdwg.mxu0
    %v651 = vld [vmem:[%s6] sm:$0xf]
    %v653 = vperm.slane %v651, 0
    %v654 = vperm.slane %v651, 1
    %v655 = vperm.slane %v651, 2
    %v656 = vperm.slane %v651, 3
    %v661 = vadd.f32 %v609, %v653
    %v662 = vadd.f32 %v622, %v654
    %v663 = vadd.f32 %v635, %v655
    %v664 = vadd.f32 %v648, %v656
    %v665 = vxor.u32 %v661, 2147483648
    %v666 = vmul.f32 %v665, 1.442695
    %v667 = vpow.pop %v666
    %v668 = vadd.f32 %v667, 1.0
    %v669 = vrcp.pop %v668
    %v670 = vmul.f32 %v668, %v669
    %v671 = vsub.f32 1.0, %v670
    %v672 = vmul.f32 %v669, %v671
    %v673 = vadd.f32 %v669, %v672
    %vm674 = vweird.f32 %v668
    %vm675 = vweird.f32 %v669
    %vm676 = vmor %vm674, %vm675
    %v677 = vsel %vm676, %v669, %v673
    %v678 = vand.u32 2147483647, %v668
    %vm679 = vcmp.eq.f32.partialorder %v678, 8.507059e+37
    %v680 = vand.u32 %v668, 2147483648
    %v681 = vor.u32 1.1754944e-38, %v680
    %v682 = vsel %vm679, %v681, %v677
    %v683 = vmul.f32 1.0, %v682
    %v684 = vxor.u32 %v662, 2147483648
    %v685 = vmul.f32 %v684, 1.442695
    %v686 = vpow.pop %v685
    %v687 = vadd.f32 %v686, 1.0
    %v688 = vrcp.pop %v687
    %v689 = vmul.f32 %v687, %v688
    %v690 = vsub.f32 1.0, %v689
    %v691 = vmul.f32 %v688, %v690
    %v692 = vadd.f32 %v688, %v691
    %vm693 = vweird.f32 %v687
    %vm694 = vweird.f32 %v688
    %vm695 = vmor %vm693, %vm694
    %v696 = vsel %vm695, %v688, %v692
    %v697 = vand.u32 2147483647, %v687
    %vm698 = vcmp.eq.f32.partialorder %v697, 8.507059e+37
    %v699 = vand.u32 %v687, 2147483648
    %v700 = vor.u32 1.1754944e-38, %v699
    %v701 = vsel %vm698, %v700, %v696
    %v702 = vmul.f32 1.0, %v701
    %v703 = vtanh.pop %v663
    %v704 = vxor.u32 %v664, 2147483648
    %v705 = vmul.f32 %v704, 1.442695
    %v706 = vpow.pop %v705
    %v707 = vadd.f32 %v706, 1.0
    %v708 = vrcp.pop %v707
    %v709 = vmul.f32 %v707, %v708
    %v710 = vsub.f32 1.0, %v709
    %v711 = vmul.f32 %v708, %v710
    %v712 = vadd.f32 %v708, %v711
    %vm713 = vweird.f32 %v707
    %vm714 = vweird.f32 %v708
    %vm715 = vmor %vm713, %vm714
    %v716 = vsel %vm715, %v708, %v712
    %v717 = vand.u32 2147483647, %v707
    %vm718 = vcmp.eq.f32.partialorder %v717, 8.507059e+37
    %v719 = vand.u32 %v707, 2147483648
    %v720 = vor.u32 1.1754944e-38, %v719
    %v721 = vsel %vm718, %v720, %v716
    %v722 = vmul.f32 1.0, %v721
    %v723 = vld [vmem:[#allocation7] sm:$0xff]
    %v724 = vmul.f32 %v702, %v723
    %v725 = vmul.f32 %v683, %v703
    %v726 = vadd.f32 %v724, %v725
    %v727 = vtanh.pop %v726
    %v728 = vmul.f32 %v722, %v727
    %v729 = vld [vmem:[#allocation8] sm:$0xf]
    %v730 = vld [vmem:[#allocation8 + $0x4] sm:$0xf]
    %v731 = vld [vmem:[#allocation8 + $0x8] sm:$0xf]
    %v732 = vld [vmem:[#allocation8 + $0xc] sm:$0xf]
    %v733 = vld [vmem:[#allocation8 + $0x10] sm:$0xf]
    %v734 = vld [vmem:[#allocation8 + $0x14] sm:$0xf]
    %v735 = vld [vmem:[#allocation8 + $0x18] sm:$0xf]
    %v736 = vld [vmem:[#allocation8 + $0x1c] sm:$0xf]
    %v737 = vld [vmem:[#allocation8 + $0x20] sm:$0xf]
    %v738 = vld [vmem:[#allocation8 + $0x24] sm:$0xf]
    %v739 = vld [vmem:[#allocation8 + $0x28] sm:$0xf]
    %v740 = vld [vmem:[#allocation8 + $0x2c] sm:$0xf]
    %v741 = vld [vmem:[#allocation8 + $0x30] sm:$0xf]
    %v742 = vld [vmem:[#allocation8 + $0x34] sm:$0xf]
    %v743 = vld [vmem:[#allocation8 + $0x38] sm:$0xf]
    %v744 = vld [vmem:[#allocation8 + $0x3c] sm:$0xf]
    %v745 = vld [vmem:[#allocation8 + $0x40] sm:$0xf]
    %v746 = vld [vmem:[#allocation8 + $0x44] sm:$0xf]
    %v747 = vld [vmem:[#allocation8 + $0x48] sm:$0xf]
    %v748 = vld [vmem:[#allocation8 + $0x4c] sm:$0xf]
    %v749 = vld [vmem:[#allocation8 + $0x50] sm:$0xf]
    %v750 = vld [vmem:[#allocation8 + $0x54] sm:$0xf]
    %v751 = vld [vmem:[#allocation8 + $0x58] sm:$0xf]
    %v752 = vld [vmem:[#allocation8 + $0x5c] sm:$0xf]
    %v753 = vld [vmem:[#allocation8 + $0x60] sm:$0xf]
    %v754 = vld [vmem:[#allocation8 + $0x64] sm:$0xf]
    %v755 = vld [vmem:[#allocation8 + $0x68] sm:$0xf]
    %v756 = vld [vmem:[#allocation8 + $0x6c] sm:$0xf]
    %v757 = vld [vmem:[#allocation8 + $0x70] sm:$0xf]
    %v758 = vld [vmem:[#allocation8 + $0x74] sm:$0xf]
    %v759 = vld [vmem:[#allocation8 + $0x78] sm:$0xf]
    %v760 = vld [vmem:[#allocation8 + $0x7c] sm:$0xf]
    %v761 = vld [vmem:[#allocation8 + $0x80] sm:$0xf]
    %v762 = vld [vmem:[#allocation8 + $0x84] sm:$0xf]
    %v763 = vld [vmem:[#allocation8 + $0x88] sm:$0xf]
    %v764 = vld [vmem:[#allocation8 + $0x8c] sm:$0xf]
    %v765 = vld [vmem:[#allocation8 + $0x90] sm:$0xf]
    %v766 = vld [vmem:[#allocation8 + $0x94] sm:$0xf]
    %v767 = vld [vmem:[#allocation8 + $0x98] sm:$0xf]
    %v768 = vld [vmem:[#allocation8 + $0x9c] sm:$0xf]
    %v769 = vld [vmem:[#allocation8 + $0xa0] sm:$0xf]
    %v770 = vld [vmem:[#allocation8 + $0xa4] sm:$0xf]
    %v771 = vld [vmem:[#allocation8 + $0xa8] sm:$0xf]
    %v772 = vld [vmem:[#allocation8 + $0xac] sm:$0xf]
    %v773 = vld [vmem:[#allocation8 + $0xb0] sm:$0xf]
    %v774 = vld [vmem:[#allocation8 + $0xb4] sm:$0xf]
    %v775 = vld [vmem:[#allocation8 + $0xb8] sm:$0xf]
    %v776 = vld [vmem:[#allocation8 + $0xbc] sm:$0xf]
    %v777 = vld [vmem:[#allocation8 + $0xc0] sm:$0xf]
    %v778 = vld [vmem:[#allocation8 + $0xc4] sm:$0xf]
    %v779 = vld [vmem:[#allocation8 + $0xc8] sm:$0xf]
    %v780 = vld [vmem:[#allocation8 + $0xcc] sm:$0xf]
    %v781 = vld [vmem:[#allocation8 + $0xd0] sm:$0xf]
    %v782 = vld [vmem:[#allocation8 + $0xd4] sm:$0xf]
    %v783 = vld [vmem:[#allocation8 + $0xd8] sm:$0xf]
    %v784 = vld [vmem:[#allocation8 + $0xdc] sm:$0xf]
    %v785 = vld [vmem:[#allocation8 + $0xe0] sm:$0xf]
    %v786 = vld [vmem:[#allocation8 + $0xe4] sm:$0xf]
    %v787 = vld [vmem:[#allocation8 + $0xe8] sm:$0xf]
    %v788 = vld [vmem:[#allocation8 + $0xec] sm:$0xf]
    %v789 = vld [vmem:[#allocation8 + $0xf0] sm:$0xf]
    %v790 = vld [vmem:[#allocation8 + $0xf4] sm:$0xf]
    %v791 = vld [vmem:[#allocation8 + $0xf8] sm:$0xf]
    %v792 = vld [vmem:[#allocation8 + $0xfc] sm:$0xf]
    %v793 = vld [vmem:[#allocation8 + $0x100] sm:$0xf]
    %v794 = vld [vmem:[#allocation8 + $0x104] sm:$0xf]
    %v795 = vld [vmem:[#allocation8 + $0x108] sm:$0xf]
    %v796 = vld [vmem:[#allocation8 + $0x10c] sm:$0xf]
    %v797 = vld [vmem:[#allocation8 + $0x110] sm:$0xf]
    %v798 = vld [vmem:[#allocation8 + $0x114] sm:$0xf]
    %v799 = vld [vmem:[#allocation8 + $0x118] sm:$0xf]
    %v800 = vld [vmem:[#allocation8 + $0x11c] sm:$0xf]
    %v801 = vld [vmem:[#allocation8 + $0x120] sm:$0xf]
    %v802 = vld [vmem:[#allocation8 + $0x124] sm:$0xf]
    %v803 = vld [vmem:[#allocation8 + $0x128] sm:$0xf]
    %v804 = vld [vmem:[#allocation8 + $0x12c] sm:$0xf]
    %v805 = vld [vmem:[#allocation8 + $0x130] sm:$0xf]
    %v806 = vld [vmem:[#allocation8 + $0x134] sm:$0xf]
    %v807 = vld [vmem:[#allocation8 + $0x138] sm:$0xf]
    %v808 = vld [vmem:[#allocation8 + $0x13c] sm:$0xf]
    %v809 = vld [vmem:[#allocation8 + $0x140] sm:$0xf]
    %v810 = vld [vmem:[#allocation8 + $0x144] sm:$0xf]
    %v811 = vld [vmem:[#allocation8 + $0x148] sm:$0xf]
    %v812 = vld [vmem:[#allocation8 + $0x14c] sm:$0xf]
    %v813 = vld [vmem:[#allocation8 + $0x150] sm:$0xf]
    %v814 = vld [vmem:[#allocation8 + $0x154] sm:$0xf]
    %v815 = vld [vmem:[#allocation8 + $0x158] sm:$0xf]
    %v816 = vld [vmem:[#allocation8 + $0x15c] sm:$0xf]
    %v817 = vld [vmem:[#allocation8 + $0x160] sm:$0xf]
    %v818 = vld [vmem:[#allocation8 + $0x164] sm:$0xf]
    %v819 = vld [vmem:[#allocation8 + $0x168] sm:$0xf]
    %v820 = vld [vmem:[#allocation8 + $0x16c] sm:$0xf]
    %v821 = vld [vmem:[#allocation8 + $0x170] sm:$0xf]
    %v822 = vld [vmem:[#allocation8 + $0x174] sm:$0xf]
    %v823 = vld [vmem:[#allocation8 + $0x178] sm:$0xf]
    %v824 = vld [vmem:[#allocation8 + $0x17c] sm:$0xf]
    %v825 = vld [vmem:[#allocation8 + $0x180] sm:$0xf]
    %v826 = vld [vmem:[#allocation8 + $0x184] sm:$0xf]
    %v827 = vld [vmem:[#allocation8 + $0x188] sm:$0xf]
    %v828 = vld [vmem:[#allocation8 + $0x18c] sm:$0xf]
    %v829 = vld [vmem:[#allocation8 + $0x190] sm:$0xf]
    %v830 = vld [vmem:[#allocation8 + $0x194] sm:$0xf]
    %v831 = vld [vmem:[#allocation8 + $0x198] sm:$0xf]
    %v832 = vld [vmem:[#allocation8 + $0x19c] sm:$0xf]
    %v833 = vld [vmem:[#allocation8 + $0x1a0] sm:$0xf]
    %v834 = vld [vmem:[#allocation8 + $0x1a4] sm:$0xf]
    %v835 = vld [vmem:[#allocation8 + $0x1a8] sm:$0xf]
    %v836 = vld [vmem:[#allocation8 + $0x1ac] sm:$0xf]
    %v837 = vld [vmem:[#allocation8 + $0x1b0] sm:$0xf]
    %v838 = vld [vmem:[#allocation8 + $0x1b4] sm:$0xf]
    %v839 = vld [vmem:[#allocation8 + $0x1b8] sm:$0xf]
    %v840 = vld [vmem:[#allocation8 + $0x1bc] sm:$0xf]
    %v841 = vld [vmem:[#allocation8 + $0x1c0] sm:$0xf]
    %v842 = vld [vmem:[#allocation8 + $0x1c4] sm:$0xf]
    %v843 = vld [vmem:[#allocation8 + $0x1c8] sm:$0xf]
    %v844 = vld [vmem:[#allocation8 + $0x1cc] sm:$0xf]
    %v845 = vld [vmem:[#allocation8 + $0x1d0] sm:$0xf]
    %v846 = vld [vmem:[#allocation8 + $0x1d4] sm:$0xf]
    %v847 = vld [vmem:[#allocation8 + $0x1d8] sm:$0xf]
    %v848 = vld [vmem:[#allocation8 + $0x1dc] sm:$0xf]
    %v849 = vld [vmem:[#allocation8 + $0x1e0] sm:$0xf]
    %v850 = vld [vmem:[#allocation8 + $0x1e4] sm:$0xf]
    %v851 = vld [vmem:[#allocation8 + $0x1e8] sm:$0xf]
    %v852 = vld [vmem:[#allocation8 + $0x1ec] sm:$0xf]
    %v853 = vld [vmem:[#allocation8 + $0x1f0] sm:$0xf]
    %v854 = vld [vmem:[#allocation8 + $0x1f4] sm:$0xf]
    %v855 = vld [vmem:[#allocation8 + $0x1f8] sm:$0xf]
    %v856 = vld [vmem:[#allocation8 + $0x1fc] sm:$0xf]
    %v857 = vpack.c.bf16 %v728, %v728
    %v859 = vrot.slane %v857, 3
    %vm860 = vcmask 1040384
    %v863 = vsel %vm860, %v857, %v859
    %vm865 = vcmask 1041409
    %v866 = vsel %vm865, %v857, %v859
    %v868 = vrot.slane %v866, 1
    %vm869 = vcmask 1042434
    %v870 = vsel %vm869, %v857, %v859
    %v872 = vrot.slane %v870, 2
    %vm873 = vcmask 1043459
    %v874 = vsel %vm873, %v857, %v859
    %v876 = vrot.slane %v874, 3
    %v877 = vunpack.i.l.s16 %v863
    %v878 = vunpack.i.h.s16 %v863
    %v879 = vunpack.i.l.s16 %v868
    %v880 = vunpack.i.h.s16 %v868
    %v881 = vunpack.i.l.s16 %v872
    %v882 = vunpack.i.h.s16 %v872
    %v883 = vunpack.i.l.s16 %v876
    %v884 = vunpack.i.h.s16 %v876
    %v885 = vpack.i.b16 %v877, %v877
    %v886 = vperm.slane %v885, 0
    %v904 = vunpack.c.l.b16 %v729
    %v905 = vunpack.c.l.b16 %v730
    %v906 = vunpack.c.l.b16 %v731
    %v907 = vunpack.c.l.b16 %v732
    %v908 = vunpack.c.l.b16 %v733
    %v909 = vunpack.c.l.b16 %v734
    %v910 = vunpack.c.l.b16 %v735
    %v911 = vunpack.c.l.b16 %v736
    %v912 = vunpack.c.l.b16 %v737
    %v913 = vunpack.c.l.b16 %v738
    %v914 = vunpack.c.l.b16 %v739
    %v915 = vunpack.c.l.b16 %v740
    %v916 = vunpack.c.l.b16 %v741
    %v917 = vunpack.c.l.b16 %v742
    %v918 = vunpack.c.l.b16 %v743
    %v919 = vunpack.c.l.b16 %v744
    %v920 = vpack.c.b16 %v905, %v904
    %v921 = vpack.c.b16 %v907, %v906
    %v922 = vpack.c.b16 %v909, %v908
    %v923 = vpack.c.b16 %v911, %v910
    %v924 = vpack.c.b16 %v913, %v912
    %v925 = vpack.c.b16 %v915, %v914
    %v926 = vpack.c.b16 %v917, %v916
    %v927 = vpack.c.b16 %v919, %v918
    %936 = vmatpush.bf16.xpose.msra.mxu0 %v927
    %937 = vmatpush.bf16.xpose.msra.mxu0 %v926
    %938 = vmatpush.bf16.xpose.msra.mxu0 %v925
    %939 = vmatpush.bf16.xpose.msra.mxu0 %v924
    %940 = vmatpush.bf16.xpose.msra.mxu0 %v923
    %941 = vmatpush.bf16.xpose.msra.mxu0 %v922
    %942 = vmatpush.bf16.xpose.msra.mxu0 %v921
    %943 = vmatpush.bf16.xpose.msra.mxu0 %v920
    %944 = vmatmul.bf16.gmra.mxu0 %v886
    %v945 = vpop.f32.mrf.mxu0
    %v946 = vadd.f32 0.0, %v945
    %v947 = vpop.f32.mrf.mxu0
    %948 = vdwg.mxu0
    %v949 = vpack.i.b16 %v878, %v878
    %v950 = vperm.slane %v949, 0
    %v968 = vunpack.c.l.b16 %v745
    %v969 = vunpack.c.l.b16 %v746
    %v970 = vunpack.c.l.b16 %v747
    %v971 = vunpack.c.l.b16 %v748
    %v972 = vunpack.c.l.b16 %v749
    %v973 = vunpack.c.l.b16 %v750
    %v974 = vunpack.c.l.b16 %v751
    %v975 = vunpack.c.l.b16 %v752
    %v976 = vunpack.c.l.b16 %v753
    %v977 = vunpack.c.l.b16 %v754
    %v978 = vunpack.c.l.b16 %v755
    %v979 = vunpack.c.l.b16 %v756
    %v980 = vunpack.c.l.b16 %v757
    %v981 = vunpack.c.l.b16 %v758
    %v982 = vunpack.c.l.b16 %v759
    %v983 = vunpack.c.l.b16 %v760
    %v984 = vpack.c.b16 %v969, %v968
    %v985 = vpack.c.b16 %v971, %v970
    %v986 = vpack.c.b16 %v973, %v972
    %v987 = vpack.c.b16 %v975, %v974
    %v988 = vpack.c.b16 %v977, %v976
    %v989 = vpack.c.b16 %v979, %v978
    %v990 = vpack.c.b16 %v981, %v980
    %v991 = vpack.c.b16 %v983, %v982
    %1000 = vmatpush.bf16.xpose.msra.mxu0 %v991
    %1001 = vmatpush.bf16.xpose.msra.mxu0 %v990
    %1002 = vmatpush.bf16.xpose.msra.mxu0 %v989
    %1003 = vmatpush.bf16.xpose.msra.mxu0 %v988
    %1004 = vmatpush.bf16.xpose.msra.mxu0 %v987
    %1005 = vmatpush.bf16.xpose.msra.mxu0 %v986
    %1006 = vmatpush.bf16.xpose.msra.mxu0 %v985
    %1007 = vmatpush.bf16.xpose.msra.mxu0 %v984
    %1008 = vmatmul.bf16.gmra.mxu0 %v950
    %v1009 = vpop.f32.mrf.mxu0
    %v1010 = vadd.f32 0.0, %v1009
    %v1011 = vpop.f32.mrf.mxu0
    %1012 = vdwg.mxu0
    %v1013 = vpack.i.b16 %v879, %v879
    %v1014 = vperm.slane %v1013, 0
    %v1032 = vunpack.c.l.b16 %v761
    %v1033 = vunpack.c.l.b16 %v762
    %v1034 = vunpack.c.l.b16 %v763
    %v1035 = vunpack.c.l.b16 %v764
    %v1036 = vunpack.c.l.b16 %v765
    %v1037 = vunpack.c.l.b16 %v766
    %v1038 = vunpack.c.l.b16 %v767
    %v1039 = vunpack.c.l.b16 %v768
    %v1040 = vunpack.c.l.b16 %v769
    %v1041 = vunpack.c.l.b16 %v770
    %v1042 = vunpack.c.l.b16 %v771
    %v1043 = vunpack.c.l.b16 %v772
    %v1044 = vunpack.c.l.b16 %v773
    %v1045 = vunpack.c.l.b16 %v774
    %v1046 = vunpack.c.l.b16 %v775
    %v1047 = vunpack.c.l.b16 %v776
    %v1048 = vpack.c.b16 %v1033, %v1032
    %v1049 = vpack.c.b16 %v1035, %v1034
    %v1050 = vpack.c.b16 %v1037, %v1036
    %v1051 = vpack.c.b16 %v1039, %v1038
    %v1052 = vpack.c.b16 %v1041, %v1040
    %v1053 = vpack.c.b16 %v1043, %v1042
    %v1054 = vpack.c.b16 %v1045, %v1044
    %v1055 = vpack.c.b16 %v1047, %v1046
    %1064 = vmatpush.bf16.xpose.msra.mxu0 %v1055
    %1065 = vmatpush.bf16.xpose.msra.mxu0 %v1054
    %1066 = vmatpush.bf16.xpose.msra.mxu0 %v1053
    %1067 = vmatpush.bf16.xpose.msra.mxu0 %v1052
    %1068 = vmatpush.bf16.xpose.msra.mxu0 %v1051
    %1069 = vmatpush.bf16.xpose.msra.mxu0 %v1050
    %1070 = vmatpush.bf16.xpose.msra.mxu0 %v1049
    %1071 = vmatpush.bf16.xpose.msra.mxu0 %v1048
    %1072 = vmatmul.bf16.gmra.mxu0 %v1014
    %v1073 = vpop.f32.mrf.mxu0
    %v1074 = vadd.f32 0.0, %v1073
    %v1075 = vpop.f32.mrf.mxu0
    %1076 = vdwg.mxu0
    %v1077 = vpack.i.b16 %v880, %v880
    %v1078 = vperm.slane %v1077, 0
    %v1096 = vunpack.c.l.b16 %v777
    %v1097 = vunpack.c.l.b16 %v778
    %v1098 = vunpack.c.l.b16 %v779
    %v1099 = vunpack.c.l.b16 %v780
    %v1100 = vunpack.c.l.b16 %v781
    %v1101 = vunpack.c.l.b16 %v782
    %v1102 = vunpack.c.l.b16 %v783
    %v1103 = vunpack.c.l.b16 %v784
    %v1104 = vunpack.c.l.b16 %v785
    %v1105 = vunpack.c.l.b16 %v786
    %v1106 = vunpack.c.l.b16 %v787
    %v1107 = vunpack.c.l.b16 %v788
    %v1108 = vunpack.c.l.b16 %v789
    %v1109 = vunpack.c.l.b16 %v790
    %v1110 = vunpack.c.l.b16 %v791
    %v1111 = vunpack.c.l.b16 %v792
    %v1112 = vpack.c.b16 %v1097, %v1096
    %v1113 = vpack.c.b16 %v1099, %v1098
    %v1114 = vpack.c.b16 %v1101, %v1100
    %v1115 = vpack.c.b16 %v1103, %v1102
    %v1116 = vpack.c.b16 %v1105, %v1104
    %v1117 = vpack.c.b16 %v1107, %v1106
    %v1118 = vpack.c.b16 %v1109, %v1108
    %v1119 = vpack.c.b16 %v1111, %v1110
    %1128 = vmatpush.bf16.xpose.msra.mxu0 %v1119
    %1129 = vmatpush.bf16.xpose.msra.mxu0 %v1118
    %1130 = vmatpush.bf16.xpose.msra.mxu0 %v1117
    %1131 = vmatpush.bf16.xpose.msra.mxu0 %v1116
    %1132 = vmatpush.bf16.xpose.msra.mxu0 %v1115
    %1133 = vmatpush.bf16.xpose.msra.mxu0 %v1114
    %1134 = vmatpush.bf16.xpose.msra.mxu0 %v1113
    %1135 = vmatpush.bf16.xpose.msra.mxu0 %v1112
    %1136 = vmatmul.bf16.gmra.mxu0 %v1078
    %v1137 = vpop.f32.mrf.mxu0
    %v1138 = vadd.f32 0.0, %v1137
    %v1139 = vpop.f32.mrf.mxu0
    %1140 = vdwg.mxu0
    %v1141 = vpack.i.b16 %v881, %v881
    %v1142 = vperm.slane %v1141, 0
    %v1160 = vunpack.c.l.b16 %v793
    %v1161 = vunpack.c.l.b16 %v794
    %v1162 = vunpack.c.l.b16 %v795
    %v1163 = vunpack.c.l.b16 %v796
    %v1164 = vunpack.c.l.b16 %v797
    %v1165 = vunpack.c.l.b16 %v798
    %v1166 = vunpack.c.l.b16 %v799
    %v1167 = vunpack.c.l.b16 %v800
    %v1168 = vunpack.c.l.b16 %v801
    %v1169 = vunpack.c.l.b16 %v802
    %v1170 = vunpack.c.l.b16 %v803
    %v1171 = vunpack.c.l.b16 %v804
    %v1172 = vunpack.c.l.b16 %v805
    %v1173 = vunpack.c.l.b16 %v806
    %v1174 = vunpack.c.l.b16 %v807
    %v1175 = vunpack.c.l.b16 %v808
    %v1176 = vpack.c.b16 %v1161, %v1160
    %v1177 = vpack.c.b16 %v1163, %v1162
    %v1178 = vpack.c.b16 %v1165, %v1164
    %v1179 = vpack.c.b16 %v1167, %v1166
    %v1180 = vpack.c.b16 %v1169, %v1168
    %v1181 = vpack.c.b16 %v1171, %v1170
    %v1182 = vpack.c.b16 %v1173, %v1172
    %v1183 = vpack.c.b16 %v1175, %v1174
    %1192 = vmatpush.bf16.xpose.msra.mxu0 %v1183
    %1193 = vmatpush.bf16.xpose.msra.mxu0 %v1182
    %1194 = vmatpush.bf16.xpose.msra.mxu0 %v1181
    %1195 = vmatpush.bf16.xpose.msra.mxu0 %v1180
    %1196 = vmatpush.bf16.xpose.msra.mxu0 %v1179
    %1197 = vmatpush.bf16.xpose.msra.mxu0 %v1178
    %1198 = vmatpush.bf16.xpose.msra.mxu0 %v1177
    %1199 = vmatpush.bf16.xpose.msra.mxu0 %v1176
    %1200 = vmatmul.bf16.gmra.mxu0 %v1142
    %v1201 = vpop.f32.mrf.mxu0
    %v1202 = vadd.f32 0.0, %v1201
    %v1203 = vpop.f32.mrf.mxu0
    %1204 = vdwg.mxu0
    %v1205 = vpack.i.b16 %v882, %v882
    %v1206 = vperm.slane %v1205, 0
    %v1224 = vunpack.c.l.b16 %v809
    %v1225 = vunpack.c.l.b16 %v810
    %v1226 = vunpack.c.l.b16 %v811
    %v1227 = vunpack.c.l.b16 %v812
    %v1228 = vunpack.c.l.b16 %v813
    %v1229 = vunpack.c.l.b16 %v814
    %v1230 = vunpack.c.l.b16 %v815
    %v1231 = vunpack.c.l.b16 %v816
    %v1232 = vunpack.c.l.b16 %v817
    %v1233 = vunpack.c.l.b16 %v818
    %v1234 = vunpack.c.l.b16 %v819
    %v1235 = vunpack.c.l.b16 %v820
    %v1236 = vunpack.c.l.b16 %v821
    %v1237 = vunpack.c.l.b16 %v822
    %v1238 = vunpack.c.l.b16 %v823
    %v1239 = vunpack.c.l.b16 %v824
    %v1240 = vpack.c.b16 %v1225, %v1224
    %v1241 = vpack.c.b16 %v1227, %v1226
    %v1242 = vpack.c.b16 %v1229, %v1228
    %v1243 = vpack.c.b16 %v1231, %v1230
    %v1244 = vpack.c.b16 %v1233, %v1232
    %v1245 = vpack.c.b16 %v1235, %v1234
    %v1246 = vpack.c.b16 %v1237, %v1236
    %v1247 = vpack.c.b16 %v1239, %v1238
    %1256 = vmatpush.bf16.xpose.msra.mxu0 %v1247
    %1257 = vmatpush.bf16.xpose.msra.mxu0 %v1246
    %1258 = vmatpush.bf16.xpose.msra.mxu0 %v1245
    %1259 = vmatpush.bf16.xpose.msra.mxu0 %v1244
    %1260 = vmatpush.bf16.xpose.msra.mxu0 %v1243
    %1261 = vmatpush.bf16.xpose.msra.mxu0 %v1242
    %1262 = vmatpush.bf16.xpose.msra.mxu0 %v1241
    %1263 = vmatpush.bf16.xpose.msra.mxu0 %v1240
    %1264 = vmatmul.bf16.gmra.mxu0 %v1206
    %v1265 = vpop.f32.mrf.mxu0
    %v1266 = vadd.f32 0.0, %v1265
    %v1267 = vpop.f32.mrf.mxu0
    %1268 = vdwg.mxu0
    %v1269 = vpack.i.b16 %v883, %v883
    %v1270 = vperm.slane %v1269, 0
    %v1288 = vunpack.c.l.b16 %v825
    %v1289 = vunpack.c.l.b16 %v826
    %v1290 = vunpack.c.l.b16 %v827
    %v1291 = vunpack.c.l.b16 %v828
    %v1292 = vunpack.c.l.b16 %v829
    %v1293 = vunpack.c.l.b16 %v830
    %v1294 = vunpack.c.l.b16 %v831
    %v1295 = vunpack.c.l.b16 %v832
    %v1296 = vunpack.c.l.b16 %v833
    %v1297 = vunpack.c.l.b16 %v834
    %v1298 = vunpack.c.l.b16 %v835
    %v1299 = vunpack.c.l.b16 %v836
    %v1300 = vunpack.c.l.b16 %v837
    %v1301 = vunpack.c.l.b16 %v838
    %v1302 = vunpack.c.l.b16 %v839
    %v1303 = vunpack.c.l.b16 %v840
    %v1304 = vpack.c.b16 %v1289, %v1288
    %v1305 = vpack.c.b16 %v1291, %v1290
    %v1306 = vpack.c.b16 %v1293, %v1292
    %v1307 = vpack.c.b16 %v1295, %v1294
    %v1308 = vpack.c.b16 %v1297, %v1296
    %v1309 = vpack.c.b16 %v1299, %v1298
    %v1310 = vpack.c.b16 %v1301, %v1300
    %v1311 = vpack.c.b16 %v1303, %v1302
    %1320 = vmatpush.bf16.xpose.msra.mxu0 %v1311
    %1321 = vmatpush.bf16.xpose.msra.mxu0 %v1310
    %1322 = vmatpush.bf16.xpose.msra.mxu0 %v1309
    %1323 = vmatpush.bf16.xpose.msra.mxu0 %v1308
    %1324 = vmatpush.bf16.xpose.msra.mxu0 %v1307
    %1325 = vmatpush.bf16.xpose.msra.mxu0 %v1306
    %1326 = vmatpush.bf16.xpose.msra.mxu0 %v1305
    %1327 = vmatpush.bf16.xpose.msra.mxu0 %v1304
    %1328 = vmatmul.bf16.gmra.mxu0 %v1270
    %v1329 = vpop.f32.mrf.mxu0
    %v1330 = vadd.f32 0.0, %v1329
    %v1331 = vpop.f32.mrf.mxu0
    %1332 = vdwg.mxu0
    %v1333 = vpack.i.b16 %v884, %v884
    %v1334 = vperm.slane %v1333, 0
    %v1352 = vunpack.c.l.b16 %v841
    %v1353 = vunpack.c.l.b16 %v842
    %v1354 = vunpack.c.l.b16 %v843
    %v1355 = vunpack.c.l.b16 %v844
    %v1356 = vunpack.c.l.b16 %v845
    %v1357 = vunpack.c.l.b16 %v846
    %v1358 = vunpack.c.l.b16 %v847
    %v1359 = vunpack.c.l.b16 %v848
    %v1360 = vunpack.c.l.b16 %v849
    %v1361 = vunpack.c.l.b16 %v850
    %v1362 = vunpack.c.l.b16 %v851
    %v1363 = vunpack.c.l.b16 %v852
    %v1364 = vunpack.c.l.b16 %v853
    %v1365 = vunpack.c.l.b16 %v854
    %v1366 = vunpack.c.l.b16 %v855
    %v1367 = vunpack.c.l.b16 %v856
    %v1368 = vpack.c.b16 %v1353, %v1352
    %v1369 = vpack.c.b16 %v1355, %v1354
    %v1370 = vpack.c.b16 %v1357, %v1356
    %v1371 = vpack.c.b16 %v1359, %v1358
    %v1372 = vpack.c.b16 %v1361, %v1360
    %v1373 = vpack.c.b16 %v1363, %v1362
    %v1374 = vpack.c.b16 %v1365, %v1364
    %v1375 = vpack.c.b16 %v1367, %v1366
    %1384 = vmatpush.bf16.xpose.msra.mxu0 %v1375
    %1385 = vmatpush.bf16.xpose.msra.mxu0 %v1374
    %1386 = vmatpush.bf16.xpose.msra.mxu0 %v1373
    %1387 = vmatpush.bf16.xpose.msra.mxu0 %v1372
    %1388 = vmatpush.bf16.xpose.msra.mxu0 %v1371
    %1389 = vmatpush.bf16.xpose.msra.mxu0 %v1370
    %1390 = vmatpush.bf16.xpose.msra.mxu0 %v1369
    %1391 = vmatpush.bf16.xpose.msra.mxu0 %v1368
    %1392 = vmatmul.bf16.gmra.mxu0 %v1334
    %v1393 = vpop.f32.mrf.mxu0
    %v1394 = vadd.f32 0.0, %v1393
    %v1395 = vpop.f32.mrf.mxu0
    %1396 = vdwg.mxu0
    %v1397 = vlaneseq
    %v1398 = vand.u32 %v1397, 127
    %vm1399 = vcmp.lt.s32.totalorder %v1398, 8
    %v1400 = vsel %vm1399, %v946, -1e+30
    %v1401 = vsel %vm1399, %v1010, -1e+30
    %v1402 = vsel %vm1399, %v1074, -1e+30
    %v1403 = vsel %vm1399, %v1138, -1e+30
    %v1404 = vsel %vm1399, %v1202, -1e+30
    %v1405 = vsel %vm1399, %v1266, -1e+30
    %v1406 = vsel %vm1399, %v1330, -1e+30
    %v1407 = vsel %vm1399, %v1394, -1e+30
    %v1408 = vsel %vm860, %v1400, -inf
    %1409 = vmax.xlane.f32.xlu0 %v1408
    %v1410 = vpop.xlane.xlu0 %1409
    %v1411 = vsel %vm860, %v1401, -inf
    %1412 = vmax.xlane.f32.xlu0 %v1411
    %v1413 = vpop.xlane.xlu0 %1412
    %v1414 = vsel %vm860, %v1402, -inf
    %1415 = vmax.xlane.f32.xlu0 %v1414
    %v1416 = vpop.xlane.xlu0 %1415
    %v1417 = vsel %vm860, %v1403, -inf
    %1418 = vmax.xlane.f32.xlu0 %v1417
    %v1419 = vpop.xlane.xlu0 %1418
    %v1420 = vsel %vm860, %v1404, -inf
    %1421 = vmax.xlane.f32.xlu0 %v1420
    %v1422 = vpop.xlane.xlu0 %1421
    %v1423 = vsel %vm860, %v1405, -inf
    %1424 = vmax.xlane.f32.xlu0 %v1423
    %v1425 = vpop.xlane.xlu0 %1424
    %v1426 = vsel %vm860, %v1406, -inf
    %1427 = vmax.xlane.f32.xlu0 %v1426
    %v1428 = vpop.xlane.xlu0 %1427
    %v1429 = vsel %vm860, %v1407, -inf
    %1430 = vmax.xlane.f32.xlu0 %v1429
    %v1431 = vpop.xlane.xlu0 %1430
    %v1432 = vsub.f32 %v1400, %v1410
    %v1433 = vsub.f32 %v1401, %v1413
    %v1434 = vsub.f32 %v1402, %v1416
    %v1435 = vsub.f32 %v1403, %v1419
    %v1436 = vsub.f32 %v1404, %v1422
    %v1437 = vsub.f32 %v1405, %v1425
    %v1438 = vsub.f32 %v1406, %v1428
    %v1439 = vsub.f32 %v1407, %v1431
    %v1440 = vmul.f32 %v1432, 1.442695
    %v1441 = vpow.pop %v1440
    %v1442 = vmul.f32 %v1433, 1.442695
    %v1443 = vpow.pop %v1442
    %v1444 = vmul.f32 %v1434, 1.442695
    %v1445 = vpow.pop %v1444
    %v1446 = vmul.f32 %v1435, 1.442695
    %v1447 = vpow.pop %v1446
    %v1448 = vmul.f32 %v1436, 1.442695
    %v1449 = vpow.pop %v1448
    %v1450 = vmul.f32 %v1437, 1.442695
    %v1451 = vpow.pop %v1450
    %v1452 = vmul.f32 %v1438, 1.442695
    %v1453 = vpow.pop %v1452
    %v1454 = vmul.f32 %v1439, 1.442695
    %v1455 = vpow.pop %v1454
    %v1456 = vsel %vm860, %v1441, 0.0
    %1457 = vadd.xlane.f32.xlu0 %v1456
    %v1458 = vpop.xlane.xlu0 %1457
    %v1459 = vsel %vm860, %v1443, 0.0
    %1460 = vadd.xlane.f32.xlu0 %v1459
    %v1461 = vpop.xlane.xlu0 %1460
    %v1462 = vsel %vm860, %v1445, 0.0
    %1463 = vadd.xlane.f32.xlu0 %v1462
    %v1464 = vpop.xlane.xlu0 %1463
    %v1465 = vsel %vm860, %v1447, 0.0
    %1466 = vadd.xlane.f32.xlu0 %v1465
    %v1467 = vpop.xlane.xlu0 %1466
    %v1468 = vsel %vm860, %v1449, 0.0
    %1469 = vadd.xlane.f32.xlu0 %v1468
    %v1470 = vpop.xlane.xlu0 %1469
    %v1471 = vsel %vm860, %v1451, 0.0
    %1472 = vadd.xlane.f32.xlu0 %v1471
    %v1473 = vpop.xlane.xlu0 %1472
    %v1474 = vsel %vm860, %v1453, 0.0
    %1475 = vadd.xlane.f32.xlu0 %v1474
    %v1476 = vpop.xlane.xlu0 %1475
    %v1477 = vsel %vm860, %v1455, 0.0
    %1478 = vadd.xlane.f32.xlu0 %v1477
    %v1479 = vpop.xlane.xlu0 %1478
    %v1480 = vrcp.pop %v1458
    %v1481 = vrcp.pop %v1461
    %v1482 = vrcp.pop %v1464
    %v1483 = vrcp.pop %v1467
    %v1484 = vrcp.pop %v1470
    %v1485 = vrcp.pop %v1473
    %v1486 = vrcp.pop %v1476
    %v1487 = vrcp.pop %v1479
    %v1488 = vmul.f32 %v1441, %v1480
    %v1489 = vmul.f32 %v1443, %v1481
    %v1490 = vmul.f32 %v1445, %v1482
    %v1491 = vmul.f32 %v1447, %v1483
    %v1492 = vmul.f32 %v1449, %v1484
    %v1493 = vmul.f32 %v1451, %v1485
    %v1494 = vmul.f32 %v1453, %v1486
    %v1495 = vmul.f32 %v1455, %v1487
    %v1496 = vpack.c.bf16 %v1488, %v1488
    %v1497 = vpack.c.bf16 %v1489, %v1489
    %v1498 = vpack.c.bf16 %v1490, %v1490
    %v1499 = vpack.c.bf16 %v1491, %v1491
    %v1500 = vpack.c.bf16 %v1492, %v1492
    %v1501 = vpack.c.bf16 %v1493, %v1493
    %v1502 = vpack.c.bf16 %v1494, %v1494
    %v1503 = vpack.c.bf16 %v1495, %v1495
    %1504 = vmatpush.bf16.msra.mxu0 %v927
    %1505 = vmatpush.bf16.msra.mxu0 %v926
    %1506 = vmatpush.bf16.msra.mxu0 %v925
    %1507 = vmatpush.bf16.msra.mxu0 %v924
    %1508 = vmatpush.bf16.msra.mxu0 %v923
    %1509 = vmatpush.bf16.msra.mxu0 %v922
    %1510 = vmatpush.bf16.msra.mxu0 %v921
    %1511 = vmatpush.bf16.msra.mxu0 %v920
    %1512 = vmatmul.bf16.gmra.mxu0 %v1496
    %v1513 = vpop.f32.mrf.mxu0
    %v1514 = vadd.f32 0.0, %v1513
    %v1515 = vpop.f32.mrf.mxu0
    %1516 = vdwg.mxu0
    %1517 = vmatpush.bf16.msra.mxu0 %v991
    %1518 = vmatpush.bf16.msra.mxu0 %v990
    %1519 = vmatpush.bf16.msra.mxu0 %v989
    %1520 = vmatpush.bf16.msra.mxu0 %v988
    %1521 = vmatpush.bf16.msra.mxu0 %v987
    %1522 = vmatpush.bf16.msra.mxu0 %v986
    %1523 = vmatpush.bf16.msra.mxu0 %v985
    %1524 = vmatpush.bf16.msra.mxu0 %v984
    %1525 = vmatmul.bf16.gmra.mxu0 %v1497
    %v1526 = vpop.f32.mrf.mxu0
    %v1527 = vadd.f32 0.0, %v1526
    %v1528 = vpop.f32.mrf.mxu0
    %1529 = vdwg.mxu0
    %1530 = vmatpush.bf16.msra.mxu0 %v1055
    %1531 = vmatpush.bf16.msra.mxu0 %v1054
    %1532 = vmatpush.bf16.msra.mxu0 %v1053
    %1533 = vmatpush.bf16.msra.mxu0 %v1052
    %1534 = vmatpush.bf16.msra.mxu0 %v1051
    %1535 = vmatpush.bf16.msra.mxu0 %v1050
    %1536 = vmatpush.bf16.msra.mxu0 %v1049
    %1537 = vmatpush.bf16.msra.mxu0 %v1048
    %1538 = vmatmul.bf16.gmra.mxu0 %v1498
    %v1539 = vpop.f32.mrf.mxu0
    %v1540 = vadd.f32 0.0, %v1539
    %v1541 = vpop.f32.mrf.mxu0
    %1542 = vdwg.mxu0
    %1543 = vmatpush.bf16.msra.mxu0 %v1119
    %1544 = vmatpush.bf16.msra.mxu0 %v1118
    %1545 = vmatpush.bf16.msra.mxu0 %v1117
    %1546 = vmatpush.bf16.msra.mxu0 %v1116
    %1547 = vmatpush.bf16.msra.mxu0 %v1115
    %1548 = vmatpush.bf16.msra.mxu0 %v1114
    %1549 = vmatpush.bf16.msra.mxu0 %v1113
    %1550 = vmatpush.bf16.msra.mxu0 %v1112
    %1551 = vmatmul.bf16.gmra.mxu0 %v1499
    %v1552 = vpop.f32.mrf.mxu0
    %v1553 = vadd.f32 0.0, %v1552
    %v1554 = vpop.f32.mrf.mxu0
    %1555 = vdwg.mxu0
    %1556 = vmatpush.bf16.msra.mxu0 %v1183
    %1557 = vmatpush.bf16.msra.mxu0 %v1182
    %1558 = vmatpush.bf16.msra.mxu0 %v1181
    %1559 = vmatpush.bf16.msra.mxu0 %v1180
    %1560 = vmatpush.bf16.msra.mxu0 %v1179
    %1561 = vmatpush.bf16.msra.mxu0 %v1178
    %1562 = vmatpush.bf16.msra.mxu0 %v1177
    %1563 = vmatpush.bf16.msra.mxu0 %v1176
    %1564 = vmatmul.bf16.gmra.mxu0 %v1500
    %v1565 = vpop.f32.mrf.mxu0
    %v1566 = vadd.f32 0.0, %v1565
    %v1567 = vpop.f32.mrf.mxu0
    %1568 = vdwg.mxu0
    %1569 = vmatpush.bf16.msra.mxu0 %v1247
    %1570 = vmatpush.bf16.msra.mxu0 %v1246
    %1571 = vmatpush.bf16.msra.mxu0 %v1245
    %1572 = vmatpush.bf16.msra.mxu0 %v1244
    %1573 = vmatpush.bf16.msra.mxu0 %v1243
    %1574 = vmatpush.bf16.msra.mxu0 %v1242
    %1575 = vmatpush.bf16.msra.mxu0 %v1241
    %1576 = vmatpush.bf16.msra.mxu0 %v1240
    %1577 = vmatmul.bf16.gmra.mxu0 %v1501
    %v1578 = vpop.f32.mrf.mxu0
    %v1579 = vadd.f32 0.0, %v1578
    %v1580 = vpop.f32.mrf.mxu0
    %1581 = vdwg.mxu0
    %1582 = vmatpush.bf16.msra.mxu0 %v1311
    %1583 = vmatpush.bf16.msra.mxu0 %v1310
    %1584 = vmatpush.bf16.msra.mxu0 %v1309
    %1585 = vmatpush.bf16.msra.mxu0 %v1308
    %1586 = vmatpush.bf16.msra.mxu0 %v1307
    %1587 = vmatpush.bf16.msra.mxu0 %v1306
    %1588 = vmatpush.bf16.msra.mxu0 %v1305
    %1589 = vmatpush.bf16.msra.mxu0 %v1304
    %1590 = vmatmul.bf16.gmra.mxu0 %v1502
    %v1591 = vpop.f32.mrf.mxu0
    %v1592 = vadd.f32 0.0, %v1591
    %v1593 = vpop.f32.mrf.mxu0
    %1594 = vdwg.mxu0
    %1595 = vmatpush.bf16.msra.mxu0 %v1375
    %1596 = vmatpush.bf16.msra.mxu0 %v1374
    %1597 = vmatpush.bf16.msra.mxu0 %v1373
    %1598 = vmatpush.bf16.msra.mxu0 %v1372
    %1599 = vmatpush.bf16.msra.mxu0 %v1371
    %1600 = vmatpush.bf16.msra.mxu0 %v1370
    %1601 = vmatpush.bf16.msra.mxu0 %v1369
    %1602 = vmatpush.bf16.msra.mxu0 %v1368
    %1603 = vmatmul.bf16.gmra.mxu0 %v1503
    %v1604 = vpop.f32.mrf.mxu0
    %v1605 = vadd.f32 0.0, %v1604
    %v1606 = vpop.f32.mrf.mxu0
    %1607 = vdwg.mxu0
    %v1608 = vld [vmem:[#allocation13] sm:$0xf]
    %v1609 = vld [vmem:[#allocation13 + $0x4] sm:$0xf]
    %v1610 = vld [vmem:[#allocation13 + $0x8] sm:$0xf]
    %v1611 = vld [vmem:[#allocation13 + $0xc] sm:$0xf]
    %v1612 = vld [vmem:[#allocation13 + $0x10] sm:$0xf]
    %v1613 = vld [vmem:[#allocation13 + $0x14] sm:$0xf]
    %v1614 = vld [vmem:[#allocation13 + $0x18] sm:$0xf]
    %v1615 = vld [vmem:[#allocation13 + $0x1c] sm:$0xf]
    %v1616 = vld [vmem:[#allocation13 + $0x20] sm:$0xf]
    %v1617 = vld [vmem:[#allocation13 + $0x24] sm:$0xf]
    %v1618 = vld [vmem:[#allocation13 + $0x28] sm:$0xf]
    %v1619 = vld [vmem:[#allocation13 + $0x2c] sm:$0xf]
    %v1620 = vld [vmem:[#allocation13 + $0x30] sm:$0xf]
    %v1621 = vld [vmem:[#allocation13 + $0x34] sm:$0xf]
    %v1622 = vld [vmem:[#allocation13 + $0x38] sm:$0xf]
    %v1623 = vld [vmem:[#allocation13 + $0x3c] sm:$0xf]
    %v1624 = vpack.c.bf16 %v1514, %v1514
    %v1625 = vpack.c.bf16 %v1527, %v1527
    %v1626 = vpack.c.bf16 %v1540, %v1540
    %v1627 = vpack.c.bf16 %v1553, %v1553
    %v1628 = vpack.c.bf16 %v1566, %v1566
    %v1629 = vpack.c.bf16 %v1579, %v1579
    %v1630 = vpack.c.bf16 %v1592, %v1592
    %v1631 = vpack.c.bf16 %v1605, %v1605
    %v1632 = vld [vmem:[#allocation14] sm:$0xf]
    %v1633 = vld [vmem:[#allocation14 + $0x4] sm:$0xf]
    %v1634 = vld [vmem:[#allocation14 + $0x8] sm:$0xf]
    %v1635 = vld [vmem:[#allocation14 + $0xc] sm:$0xf]
    %v1636 = vld [vmem:[#allocation14 + $0x10] sm:$0xf]
    %v1637 = vld [vmem:[#allocation14 + $0x14] sm:$0xf]
    %v1638 = vld [vmem:[#allocation14 + $0x18] sm:$0xf]
    %v1639 = vld [vmem:[#allocation14 + $0x1c] sm:$0xf]
    %v1640 = vld [vmem:[#allocation14 + $0x20] sm:$0xf]
    %v1641 = vld [vmem:[#allocation14 + $0x24] sm:$0xf]
    %v1642 = vld [vmem:[#allocation14 + $0x28] sm:$0xf]
    %v1643 = vld [vmem:[#allocation14 + $0x2c] sm:$0xf]
    %v1644 = vld [vmem:[#allocation14 + $0x30] sm:$0xf]
    %v1645 = vld [vmem:[#allocation14 + $0x34] sm:$0xf]
    %v1646 = vld [vmem:[#allocation14 + $0x38] sm:$0xf]
    %v1647 = vld [vmem:[#allocation14 + $0x3c] sm:$0xf]
    %v1656 = vunpack.c.l.b16 %v1624
    %v1657 = vunpack.c.l.b16 %v1625
    %v1658 = vunpack.c.l.b16 %v1626
    %v1659 = vunpack.c.l.b16 %v1627
    %v1660 = vunpack.c.l.b16 %v1628
    %v1661 = vunpack.c.l.b16 %v1629
    %v1662 = vunpack.c.l.b16 %v1630
    %v1663 = vunpack.c.l.b16 %v1631
    %v1664 = vrot.slane %v1657, 7
    %v1665 = vsel %vm865, %v1664, %v1656
    %v1666 = vrot.slane %v1658, 6
    %v1667 = vsel %vm869, %v1666, %v1665
    %v1668 = vrot.slane %v1659, 5
    %v1669 = vsel %vm873, %v1668, %v1667
    %v1670 = vrot.slane %v1660, 4
    %vm1671 = vcmask 1044484
    %v1672 = vsel %vm1671, %v1670, %v1669
    %v1673 = vrot.slane %v1661, 3
    %vm1674 = vcmask 1045509
    %v1675 = vsel %vm1674, %v1673, %v1672
    %v1676 = vrot.slane %v1662, 2
    %vm1677 = vcmask 1046534
    %v1678 = vsel %vm1677, %v1676, %v1675
    %v1679 = vrot.slane %v1663, 1
    %vm1680 = vcmask 1047559
    %v1681 = vsel %vm1680, %v1679, %v1678
    %v1682 = vpack.c.b16 %v1681, %v1681
    %v1700 = vunpack.c.l.b16 %v1632
    %v1701 = vunpack.c.l.b16 %v1633
    %v1702 = vunpack.c.l.b16 %v1634
    %v1703 = vunpack.c.l.b16 %v1635
    %v1704 = vunpack.c.l.b16 %v1636
    %v1705 = vunpack.c.l.b16 %v1637
    %v1706 = vunpack.c.l.b16 %v1638
    %v1707 = vunpack.c.l.b16 %v1639
    %v1708 = vunpack.c.l.b16 %v1640
    %v1709 = vunpack.c.l.b16 %v1641
    %v1710 = vunpack.c.l.b16 %v1642
    %v1711 = vunpack.c.l.b16 %v1643
    %v1712 = vunpack.c.l.b16 %v1644
    %v1713 = vunpack.c.l.b16 %v1645
    %v1714 = vunpack.c.l.b16 %v1646
    %v1715 = vunpack.c.l.b16 %v1647
    %v1716 = vpack.c.b16 %v1701, %v1700
    %v1717 = vpack.c.b16 %v1703, %v1702
    %v1718 = vpack.c.b16 %v1705, %v1704
    %v1719 = vpack.c.b16 %v1707, %v1706
    %v1720 = vpack.c.b16 %v1709, %v1708
    %v1721 = vpack.c.b16 %v1711, %v1710
    %v1722 = vpack.c.b16 %v1713, %v1712
    %v1723 = vpack.c.b16 %v1715, %v1714
    %1732 = vmatpush.bf16.msra.mxu0 %v1723
    %1733 = vmatpush.bf16.msra.mxu0 %v1722
    %1734 = vmatpush.bf16.msra.mxu0 %v1721
    %1735 = vmatpush.bf16.msra.mxu0 %v1720
    %1736 = vmatpush.bf16.msra.mxu0 %v1719
    %1737 = vmatpush.bf16.msra.mxu0 %v1718
    %1738 = vmatpush.bf16.msra.mxu0 %v1717
    %1739 = vmatpush.bf16.msra.mxu0 %v1716
    %1740 = vmatmul.bf16.gmra.mxu0 %v1682
    %v1741 = vpop.f32.mrf.mxu0
    %v1742 = vadd.f32 0.0, %v1741
    %v1743 = vpop.f32.mrf.mxu0
    %1744 = vdwg.mxu0
    %v1761 = vunpack.c.l.b16 %v1608
    %v1762 = vunpack.c.l.b16 %v1609
    %v1763 = vunpack.c.l.b16 %v1610
    %v1764 = vunpack.c.l.b16 %v1611
    %v1765 = vunpack.c.l.b16 %v1612
    %v1766 = vunpack.c.l.b16 %v1613
    %v1767 = vunpack.c.l.b16 %v1614
    %v1768 = vunpack.c.l.b16 %v1615
    %v1769 = vunpack.c.l.b16 %v1616
    %v1770 = vunpack.c.l.b16 %v1617
    %v1771 = vunpack.c.l.b16 %v1618
    %v1772 = vunpack.c.l.b16 %v1619
    %v1773 = vunpack.c.l.b16 %v1620
    %v1774 = vunpack.c.l.b16 %v1621
    %v1775 = vunpack.c.l.b16 %v1622
    %v1776 = vunpack.c.l.b16 %v1623
    %v1777 = vpack.c.b16 %v1762, %v1761
    %v1778 = vpack.c.b16 %v1764, %v1763
    %v1779 = vpack.c.b16 %v1766, %v1765
    %v1780 = vpack.c.b16 %v1768, %v1767
    %v1781 = vpack.c.b16 %v1770, %v1769
    %v1782 = vpack.c.b16 %v1772, %v1771
    %v1783 = vpack.c.b16 %v1774, %v1773
    %v1784 = vpack.c.b16 %v1776, %v1775
    %1793 = vmatpush.bf16.msra.mxu0 %v1784
    %1794 = vmatpush.bf16.msra.mxu0 %v1783
    %1795 = vmatpush.bf16.msra.mxu0 %v1782
    %1796 = vmatpush.bf16.msra.mxu0 %v1781
    %1797 = vmatpush.bf16.msra.mxu0 %v1780
    %1798 = vmatpush.bf16.msra.mxu0 %v1779
    %1799 = vmatpush.bf16.msra.mxu0 %v1778
    %1800 = vmatpush.bf16.msra.mxu0 %v1777
    %1801 = vmatmul.bf16.gmra.mxu0 %v857
    %v1802 = vpop.f32.mrf.mxu0
    %v1803 = vadd.f32 %v1742, %v1802
    %v1804 = vpop.f32.mrf.mxu0
    %1805 = vdwg.mxu0
    %v1806 = vld [vmem:[%s9] sm:$0x1]
    %v1808 = vperm.slane %v1806, 0
    %v1810 = vadd.f32 %v1803, %v1808
    %v1811 = vtanh.pop %v1810
    %1812 = vst [vmem:[#allocation16] sm:$0xff] %v728
    %1813 = vst [vmem:[#allocation17] sm:$0xff] %v726
    %v1822 = vrot.slane %v1489, 7
    %v1823 = vsel %vm865, %v1822, %v1488
    %v1824 = vrot.slane %v1490, 6
    %v1825 = vsel %vm869, %v1824, %v1823
    %v1826 = vrot.slane %v1491, 5
    %v1827 = vsel %vm873, %v1826, %v1825
    %v1828 = vrot.slane %v1492, 4
    %v1829 = vsel %vm1671, %v1828, %v1827
    %v1830 = vrot.slane %v1493, 3
    %v1831 = vsel %vm1674, %v1830, %v1829
    %v1832 = vrot.slane %v1494, 2
    %v1833 = vsel %vm1677, %v1832, %v1831
    %v1834 = vrot.slane %v1495, 1
    %v1835 = vsel %vm1680, %v1834, %v1833
    %1837 = vst [vmem:[#allocation19] sm:$0xff] %v1835
    %v1838 = vpack.c.bf16 %v1811, %v1811
    %1839 = vst [vmem:[#allocation20] sm:$0xf] %v1838
    // Predicated region
    $region74: #{tpu_custom_call.1} parent=1 // pred_check
      _
    $region75: #{tpu_custom_call.1} parent=1 // pred_check_branch
      %1841 = sbr.rel (0) target = $region77
    $region76: #{tpu_custom_call.1} parent=1 // pred_region
      %1843 = vsyncadd [#allocation4], 0
      %s1845 = sshll.u32 [#allocation16], 4
      %s1846 = int_to_ptr.vmem [resolvable:$true] %s1845
      %s1847 = sshll.u32 %s10, 4
      %s1848 = int_to_ptr.hbm [resolvable:$true] %s1847
      %1850 = dma.vmem_to_hbm [thread:$0]  %s1846, 128, %s1848, [#allocation4]
    $region77: #{tpu_custom_call.1} parent=1 // pred_fallthru
      _
    // Predicated region
    $region78: #{tpu_custom_call.1} parent=1 // pred_check
      _
    $region79: #{tpu_custom_call.1} parent=1 // pred_check_branch
      %1852 = sbr.rel (0) target = $region81
    $region80: #{tpu_custom_call.1} parent=1 // pred_region
      %1854 = vsyncadd [#allocation18], 0
      %s1856 = sshll.u32 [#allocation17], 4
      %s1857 = int_to_ptr.vmem [resolvable:$true] %s1856
      %s1858 = sshll.u32 %s11, 4
      %s1859 = int_to_ptr.hbm [resolvable:$true] %s1858
      %1861 = dma.vmem_to_hbm [thread:$0]  %s1857, 128, %s1859, [#allocation18]
    $region81: #{tpu_custom_call.1} parent=1 // pred_fallthru
      _
    // Predicated region
    $region82: #{tpu_custom_call.1} parent=1 // pred_check
      _
    $region83: #{tpu_custom_call.1} parent=1 // pred_check_branch
      %1863 = sbr.rel (0) target = $region85
    $region84: #{tpu_custom_call.1} parent=1 // pred_region
      %1865 = vsyncadd [#allocation18], 0
      %s1867 = sshll.u32 [#allocation19], 4
      %s1868 = int_to_ptr.vmem [resolvable:$true] %s1867
      %s1869 = sshll.u32 %s12, 4
      %s1870 = int_to_ptr.hbm [resolvable:$true] %s1869
      %1872 = dma.vmem_to_hbm [thread:$0]  %s1868, 128, %s1870, [#allocation18]
    $region85: #{tpu_custom_call.1} parent=1 // pred_fallthru
      _
    // Predicated region
    $region86: #{tpu_custom_call.1} parent=1 // pred_check
      _
    $region87: #{tpu_custom_call.1} parent=1 // pred_check_branch
      %1874 = sbr.rel (0) target = $region89
    $region88: #{tpu_custom_call.1} parent=1 // pred_region
      %1876 = vsyncadd [#allocation21], 0
      %s1878 = sshll.u32 [#allocation20], 4
      %s1879 = int_to_ptr.vmem [resolvable:$true] %s1878
      %s1880 = sshll.u32 %s13, 4
      %s1881 = int_to_ptr.hbm [resolvable:$true] %s1880
      %1883 = dma.vmem_to_hbm [thread:$0]  %s1879, 64, %s1881, [#allocation21]
    $region89: #{tpu_custom_call.1} parent=1 // pred_fallthru
      _
    // Predicated region
    $region90: #{tpu_custom_call.1} parent=1 // pred_check
      _
    $region91: #{tpu_custom_call.1} parent=1 // pred_check_branch
      %1885 = sbr.rel (0) target = $region93
    $region92: #{tpu_custom_call.1} parent=1 // pred_region
      %1887 = dma.done [#allocation4], 128
    $region93: #{tpu_custom_call.1} parent=1 // pred_fallthru
      _
    // Predicated region
    $region94: #{tpu_custom_call.1} parent=1 // pred_check
      _
    $region95: #{tpu_custom_call.1} parent=1 // pred_check_branch
      %1889 = sbr.rel (0) target = $region97
    $region96: #{tpu_custom_call.1} parent=1 // pred_region
      %1891 = dma.done [#allocation18], 128
    $region97: #{tpu_custom_call.1} parent=1 // pred_fallthru
      _
    // Predicated region
    $region98: #{tpu_custom_call.1} parent=1 // pred_check
      _
    $region99: #{tpu_custom_call.1} parent=1 // pred_check_branch
      %1893 = sbr.rel (0) target = $region101
    $region100: #{tpu_custom_call.1} parent=1 // pred_region
      %1895 = dma.done [#allocation18], 128
    $region101: #{tpu_custom_call.1} parent=1 // pred_fallthru
      _
    // Predicated region
    $region102: #{tpu_custom_call.1} parent=1 // pred_check
      _
    $region103: #{tpu_custom_call.1} parent=1 // pred_check_branch
      %1897 = sbr.rel (0) target = $region105
    $region104: #{tpu_custom_call.1} parent=1 // pred_region
      %1899 = dma.done [#allocation21], 64
    $region105: #{tpu_custom_call.1} parent=1 // pred_fallthru
      _
    %1900 = vsyncpa [#allocation3], 1
    %1901 = vsyncpa [#allocation6], 1
    %1902 = vsyncpa [#allocation9], 1
    %1903 = vsyncpa [#allocation12], 1
    %1904 = vsyncpa [#allocation15], 1
    %1905 = vsyncpa [#allocation4], 1
    %1906 = vsyncpa [#allocation18], 1
    %1907 = vsyncpa [#allocation21], 1

</llo_original>
